<compile_context>
chip_gen: v7x
topology: tpu7x:2x2x1
jax: 0.10.0
libtpu: 0.0.40
codegen_flags: <defaults>
</compile_context>

<pallas_src>
import jax
import jax.numpy as jnp
from jax import lax
from jax.experimental import pallas as pl
from jax.experimental.pallas import tpu as pltpu  # noqa: F401  (TPU backend)

# ----------------------------- configuration --------------------------------
B = 2            # batch
S = 8            # sequence length
H = 32           # bert hidden size
L = 12           # number of bert layers (hidden_states has L+1 entries)
NH = L + 1       # number of hidden states
G = 3            # groups
STEP = NH // G   # layers averaged per group (= 4; hidden state 12 dropped, as in torch)
OUT = 32         # mcan output_dim
C = 4            # image channels
IMG = 16         # image spatial size
IMG_DIM = 32     # resnet feature dim
VOCAB = 100
VOCAB_PAD = 128  # padded to one lane tile
BS = B * S
GH = G * H
GOUT = G * OUT
LANES = 128

assert STEP >= 1 and G * STEP <= NH, "group mean indexing out of range"
assert H + GOUT == LANES, "fused q/v projection expects H + G*OUT == 128"


# --------------------------- parameter slab layout ---------------------------
def _build_layout():
    names_rows = [
        ("emb", VOCAB_PAD),      # [128, H]        embedding table (vocab padded)
        ("bert_w", L * H),       # [L*H, H]        layer l at rows off + l*H
        ("bert_b", L),           # [L, H]
        ("res_w", B * C),        # [B*C, IMG_DIM]  res_w tiled over batch
        ("res_b", 1),            # [1, IMG_DIM]
        ("img_sel", B),          # [B, B*C]        batch selector for image pooling
        ("wqv", IMG_DIM),        # [IMG_DIM, 128]  cols 0:H = wqi, cols H:128 = wv tiled x G
        ("wt_bd", GH),           # [G*H, G*OUT]    block-diag(wt, wt, wt)
        ("mcan_b", 1),           # [1, G*OUT]      mcan bias tiled x G
        ("seg_sel", GH),         # [G*H, G]        lane segment-sum selector (scores)
        ("expand", G),           # [G, G*H]        attn lane-expand selector
        ("pool_sel", B),         # [B, BS]         sequence-pool selector
        ("cls_w", GOUT),         # [G*OUT, 2]
        ("cls_b", 1),            # [1, 2]
    ]
    layout, off = {}, 0
    for name, rows in names_rows:
        off = ((off + 7) // 8) * 8          # keep every block 8-sublane aligned
        layout[name] = (off, rows)
        off += rows
    total = ((off + 7) // 8) * 8
    return layout, total


LAYOUT, SLAB_ROWS = _build_layout()


def pack_params(p):
    """Host-side one-time packing of all parameters into a single f32 slab."""
    f32 = jnp.float32
    entries = {
        "emb": jnp.zeros((VOCAB_PAD, H), f32).at[:VOCAB].set(p["emb_table"]),
        "bert_w": p["bert_w"].reshape(L * H, H),
        "bert_b": p["bert_b"].reshape(L, H),
        "res_w": jnp.tile(p["res_w"], (B, 1)),
        "res_b": p["res_b"].reshape(1, IMG_DIM),
        "img_sel": ((jnp.arange(B * C)[None, :] // C)
                    == jnp.arange(B)[:, None]).astype(f32),
        "wqv": jnp.concatenate([p["mcan_wqi"], jnp.tile(p["mcan_wv"], (1, G))], axis=1),
        "wt_bd": jnp.kron(jnp.eye(G, dtype=f32), p["mcan_wt"]),
        "mcan_b": jnp.tile(p["mcan_b"].reshape(1, OUT), (1, G)),
        "seg_sel": ((jnp.arange(GH)[:, None] // H)
                    == jnp.arange(G)[None, :]).astype(f32),
        "expand": ((jnp.arange(GH)[None, :] // H)
                   == jnp.arange(G)[:, None]).astype(f32),
        "pool_sel": ((jnp.arange(BS)[None, :] // S)
                     == jnp.arange(B)[:, None]).astype(f32),
        "cls_w": p["cls_w"],
        "cls_b": p["cls_b"].reshape(1, 2),
    }
    slab = jnp.zeros((SLAB_ROWS, LANES), f32)
    for name, arr in entries.items():
        off, rows = LAYOUT[name]
        arr = jnp.asarray(arr, f32)
        assert arr.shape[0] == rows and arr.shape[1] <= LANES, name
        slab = slab.at[off:off + rows, 0:arr.shape[1]].set(arr)
    return slab


# ------------------------------- fused kernel --------------------------------
def fused_kernel(tok_ref, img_ref, slab_ref, out_ref):
    def carve(name, cols):
        off, rows = LAYOUT[name]
        return slab_ref[off:off + rows, 0:cols]

    # ---- token inputs -------------------------------------------------------
    tok = tok_ref[...]                                    # [BS, 2] f32: (id, mask)
    ids_i = tok[:, 0:1].astype(jnp.int32)                 # [BS, 1]
    mask_col = tok[:, 1:2]                                # [BS, 1]
    mask_full = jnp.broadcast_to(mask_col, (BS, H))       # hoisted out of layer loop

    # ---- embedding lookup: one-hot matmul, K = one aligned 128 lane tile ----
    iota_v = lax.broadcasted_iota(jnp.int32, (BS, VOCAB_PAD), 1)
    onehot = (ids_i == iota_v).astype(jnp.float32)        # [BS, 128]
    emb_tbl = carve("emb", H)                             # [128, H]
    h = jnp.dot(onehot, emb_tbl, preferred_element_type=jnp.float32) * mask_full

    # ---- BERT surrogate: 12 layers; group means accumulated in-loop ---------
    bw_off, _ = LAYOUT["bert_w"]
    bias_all = carve("bert_b", H)                         # [L, H] loaded once
    group_acc = [None] * G

    def accumulate(layer_idx, val):
        if layer_idx < G * STEP:
            g = layer_idx // STEP
            group_acc[g] = val if group_acc[g] is None else group_acc[g] + val

    accumulate(0, h)
    for l in range(L):
        w_l = slab_ref[bw_off + l * H: bw_off + (l + 1) * H, 0:H]   # [H, H]
        b_l = bias_all[l:l + 1, :]                                  # [1, H]
        h = jnp.tanh(jnp.dot(h, w_l, preferred_element_type=jnp.float32) + b_l)
        h = h * mask_full
        accumulate(l + 1, h)

    inv_step = 1.0 / STEP
    # groups stacked along lanes: [BS, G*H]
    text_wide = jnp.concatenate([acc * inv_step for acc in group_acc], axis=1)

    # ---- ResNet surrogate: global average pool + linear + relu --------------
    pooled = jnp.mean(img_ref[...], axis=-1, keepdims=True)          # [B*C, 1]
    res_w_t = carve("res_w", IMG_DIM)                                 # [B*C, IMG_DIM]
    res_b = carve("res_b", IMG_DIM)                                   # [1, IMG_DIM]
    img_sel = carve("img_sel", B * C)                                 # [B, B*C]
    img_feat = jnp.maximum(
        jnp.dot(img_sel, pooled * res_w_t, preferred_element_type=jnp.float32) + res_b,
        0.0)                                                          # [B, IMG_DIM]

    # ---- MCAN surrogate: fused q/v projection, fully batched over groups ----
    wqv = carve("wqv", LANES)                                         # [IMG_DIM, 128]
    qv = jnp.dot(img_feat, wqv, preferred_element_type=jnp.float32)   # [B, 128]
    q = qv[:, 0:H]                                                    # [B, H]
    v_wide = qv[:, H:H + GOUT]                                        # [B, G*OUT]

    # attention scores: elementwise + lane segment-sum on the MXU
    q_rep = jnp.broadcast_to(q[:, None, :], (B, S, H)).reshape(BS, H)  # [BS, H]
    q_rep_w = jnp.tile(q_rep, (1, G))                                   # [BS, G*H]
    seg_sel = carve("seg_sel", G)                                       # [G*H, G]
    scores = jnp.dot(text_wide * q_rep_w, seg_sel,
                     preferred_element_type=jnp.float32)                # [BS, G]
    mask_g = jnp.broadcast_to(mask_col, (BS, G))
    scores = jnp.where(mask_g > 0.0, scores, -1e30)

    # softmax over S (leading-dim-only reshapes)
    s3 = scores.reshape(B, S, G)
    s3 = s3 - jnp.max(s3, axis=1, keepdims=True)
    p3 = jnp.exp(s3)
    denom = jnp.maximum(jnp.sum(p3, axis=1, keepdims=True), 1e-30)      # guard all-pad rows
    attn = (p3 * pl.reciprocal(denom, approx=True)).reshape(BS, G)      # [BS, G]

    # weighted pooling for all groups at once: [B, G*H]
    expand = carve("expand", GH)                                        # [G, G*H]
    attn_w = jnp.dot(attn, expand, preferred_element_type=jnp.float32)  # [BS, G*H]
    pool_sel = carve("pool_sel", BS)                                    # [B, BS]
    pooled_wide = jnp.dot(pool_sel, attn_w * text_wide,
                          preferred_element_type=jnp.float32)           # [B, G*H]

    wt_bd = carve("wt_bd", GOUT)                                        # [G*H, G*OUT]
    mcan_b = carve("mcan_b", GOUT)                                      # [1, G*OUT]
    feat = jnp.maximum(
        jnp.dot(pooled_wide, wt_bd, preferred_element_type=jnp.float32)
        + v_wide + mcan_b, 0.0)                                         # [B, G*OUT]

    # classifier: cat(outputs, -1) @ W  — single matmul, feat is already the concat
    cls_w = carve("cls_w", 2)                                           # [G*OUT, 2]
    cls_b = carve("cls_b", 2)                                           # [1, 2]
    out_ref[...] = jnp.dot(feat, cls_w, preferred_element_type=jnp.float32) + cls_b


# ------------------------------- wrapper --------------------------------------
@jax.jit
def hierarchical_encoding_network(param_slab, input_ids, attention_mask, images):
    ids_f = input_ids.astype(jnp.float32).reshape(BS, 1)
    mask_f = attention_mask.astype(jnp.float32).reshape(BS, 1)
    tok = jnp.concatenate([ids_f, mask_f], axis=1)          # [BS, 2]
    img2 = images.reshape(B * C, IMG * IMG)                 # lane-dense [B*C, 256]
    return pl.pallas_call(
        fused_kernel,
        out_shape=jax.ShapeDtypeStruct((B, 2), jnp.float32),
    )(tok, img2, param_slab)


# --------------------------------- main ---------------------------------------
if __name__ == "__main__":
    key = jax.random.PRNGKey(0)
    keys = jax.random.split(key, 12)

    params = {
        "emb_table": 0.1 * jax.random.normal(keys[0], (VOCAB, H), jnp.float32),
        "bert_w":    0.1 * jax.random.normal(keys[1], (L, H, H), jnp.float32),
        "bert_b":    0.1 * jax.random.normal(keys[2], (L, 1, H), jnp.float32),
        "res_w":     0.1 * jax.random.normal(keys[3], (C, IMG_DIM), jnp.float32),
        "res_b":     0.1 * jax.random.normal(keys[4], (1, IMG_DIM), jnp.float32),
        "mcan_wqi":  0.1 * jax.random.normal(keys[5], (IMG_DIM, H), jnp.float32),
        "mcan_wt":   0.1 * jax.random.normal(keys[6], (H, OUT), jnp.float32),
        "mcan_wv":   0.1 * jax.random.normal(keys[7], (IMG_DIM, OUT), jnp.float32),
        "mcan_b":    0.1 * jax.random.normal(keys[8], (1, OUT), jnp.float32),
        "cls_w":     0.1 * jax.random.normal(keys[9], (OUT * G, 2), jnp.float32),
        "cls_b":     0.1 * jax.random.normal(keys[10], (1, 2), jnp.float32),
    }

    # one-time host-side packing into a single parameter slab (1 input DMA)
    param_slab = jax.block_until_ready(pack_params(params))

    input_ids = jax.random.randint(keys[11], (B, S), 0, VOCAB, dtype=jnp.int32)
    # deterministic mask: row 0 full length, row 1 length S-2
    lengths = jnp.array([[S], [S - 2]], dtype=jnp.int32)
    attention_mask = (jnp.arange(S, dtype=jnp.int32)[None, :] < lengths).astype(jnp.int32)
    images = jax.random.normal(jax.random.PRNGKey(1), (B, C, IMG, IMG), jnp.float32)

    preds = hierarchical_encoding_network(param_slab, input_ids, attention_mask, images)
    preds = jax.block_until_ready(preds)
    assert preds.shape == (B, 2) and preds.dtype == jnp.float32
    assert bool(jnp.isfinite(preds).all())
    print("KERNEL_OK")
</pallas_src>

<mosaic_0001>
module attributes {stable_mosaic.version = 11 : i64} {
  func.func @fused_kernel(%arg0: memref<16x2xf32, #tpu.memory_space<vmem>>, %arg1: memref<8x256xf32, #tpu.memory_space<vmem>>, %arg2: memref<904x128xf32, #tpu.memory_space<vmem>>, %arg3: memref<2x2xf32, #tpu.memory_space<vmem>>) attributes {dimension_semantics = [], scalar_prefetch = 0 : i64, scratch_operands = 0 : i64, tpu.core_type = #tpu.core_type<tc>} {
    %c0 = arith.constant 0 : index
    %c0_0 = arith.constant 0 : index
    %0 = vector.load %arg0[%c0, %c0_0] : memref<16x2xf32, #tpu.memory_space<vmem>>, vector<16x2xf32>
    %1 = vector.extract_strided_slice %0 {offsets = [0, 0], sizes = [16, 1], strides = [1, 1]} : vector<16x2xf32> to vector<16x1xf32>
    %2 = arith.fptosi %1 : vector<16x1xf32> to vector<16x1xi32>
    %3 = vector.extract_strided_slice %0 {offsets = [0, 1], sizes = [16, 1], strides = [1, 1]} : vector<16x2xf32> to vector<16x1xf32>
    %4 = vector.shape_cast %3 : vector<16x1xf32> to vector<16x1xf32>
    %5 = vector.broadcast %4 : vector<16x1xf32> to vector<16x32xf32>
    %6 = tpu.iota {dimensions = array<i32: 1>} : vector<16x128xi32>
    %7 = vector.broadcast %2 : vector<16x1xi32> to vector<16x128xi32>
    %8 = arith.cmpi eq, %7, %6 : vector<16x128xi32>
    %9 = arith.extui %8 : vector<16x128xi1> to vector<16x128xi32>
    %10 = arith.sitofp %9 : vector<16x128xi32> to vector<16x128xf32>
    %c0_1 = arith.constant 0 : index
    %c0_2 = arith.constant 0 : index
    %11 = vector.load %arg2[%c0_1, %c0_2] : memref<904x128xf32, #tpu.memory_space<vmem>>, vector<128x32xf32>
    %cst = arith.constant dense<0.000000e+00> : vector<16x32xf32>
    %12 = tpu.matmul %10, %11, %cst {dimension_numbers = #tpu.dot_dimension_numbers<[1], [0], [0], [1], [0, 0, 1, 1], [], []>} : vector<16x128xf32>, vector<128x32xf32>, vector<16x32xf32> -> vector<16x32xf32>
    %13 = arith.mulf %12, %5 : vector<16x32xf32>
    %c512 = arith.constant 512 : index
    %c0_3 = arith.constant 0 : index
    %14 = vector.load %arg2[%c512, %c0_3] : memref<904x128xf32, #tpu.memory_space<vmem>>, vector<12x32xf32>
    %c128 = arith.constant 128 : index
    %c0_4 = arith.constant 0 : index
    %15 = vector.load %arg2[%c128, %c0_4] : memref<904x128xf32, #tpu.memory_space<vmem>>, vector<32x32xf32>
    %16 = vector.extract_strided_slice %14 {offsets = [0, 0], sizes = [1, 32], strides = [1, 1]} : vector<12x32xf32> to vector<1x32xf32>
    %cst_5 = arith.constant dense<0.000000e+00> : vector<16x32xf32>
    %17 = tpu.matmul %13, %15, %cst_5 {dimension_numbers = #tpu.dot_dimension_numbers<[1], [0], [0], [1], [0, 0, 1, 1], [], []>} : vector<16x32xf32>, vector<32x32xf32>, vector<16x32xf32> -> vector<16x32xf32>
    %18 = vector.broadcast %16 : vector<1x32xf32> to vector<16x32xf32>
    %19 = arith.addf %17, %18 : vector<16x32xf32>
    %20 = math.tanh %19 : vector<16x32xf32>
    %21 = arith.mulf %20, %5 : vector<16x32xf32>
    %22 = arith.addf %13, %21 : vector<16x32xf32>
    %c160 = arith.constant 160 : index
    %c0_6 = arith.constant 0 : index
    %23 = vector.load %arg2[%c160, %c0_6] : memref<904x128xf32, #tpu.memory_space<vmem>>, vector<32x32xf32>
    %24 = vector.extract_strided_slice %14 {offsets = [1, 0], sizes = [1, 32], strides = [1, 1]} : vector<12x32xf32> to vector<1x32xf32>
    %cst_7 = arith.constant dense<0.000000e+00> : vector<16x32xf32>
    %25 = tpu.matmul %21, %23, %cst_7 {dimension_numbers = #tpu.dot_dimension_numbers<[1], [0], [0], [1], [0, 0, 1, 1], [], []>} : vector<16x32xf32>, vector<32x32xf32>, vector<16x32xf32> -> vector<16x32xf32>
    %26 = vector.broadcast %24 : vector<1x32xf32> to vector<16x32xf32>
    %27 = arith.addf %25, %26 : vector<16x32xf32>
    %28 = math.tanh %27 : vector<16x32xf32>
    %29 = arith.mulf %28, %5 : vector<16x32xf32>
    %30 = arith.addf %22, %29 : vector<16x32xf32>
    %c192 = arith.constant 192 : index
    %c0_8 = arith.constant 0 : index
    %31 = vector.load %arg2[%c192, %c0_8] : memref<904x128xf32, #tpu.memory_space<vmem>>, vector<32x32xf32>
    %32 = vector.extract_strided_slice %14 {offsets = [2, 0], sizes = [1, 32], strides = [1, 1]} : vector<12x32xf32> to vector<1x32xf32>
    %cst_9 = arith.constant dense<0.000000e+00> : vector<16x32xf32>
    %33 = tpu.matmul %29, %31, %cst_9 {dimension_numbers = #tpu.dot_dimension_numbers<[1], [0], [0], [1], [0, 0, 1, 1], [], []>} : vector<16x32xf32>, vector<32x32xf32>, vector<16x32xf32> -> vector<16x32xf32>
    %34 = vector.broadcast %32 : vector<1x32xf32> to vector<16x32xf32>
    %35 = arith.addf %33, %34 : vector<16x32xf32>
    %36 = math.tanh %35 : vector<16x32xf32>
    %37 = arith.mulf %36, %5 : vector<16x32xf32>
    %38 = arith.addf %30, %37 : vector<16x32xf32>
    %c224 = arith.constant 224 : index
    %c0_10 = arith.constant 0 : index
    %39 = vector.load %arg2[%c224, %c0_10] : memref<904x128xf32, #tpu.memory_space<vmem>>, vector<32x32xf32>
    %40 = vector.extract_strided_slice %14 {offsets = [3, 0], sizes = [1, 32], strides = [1, 1]} : vector<12x32xf32> to vector<1x32xf32>
    %cst_11 = arith.constant dense<0.000000e+00> : vector<16x32xf32>
    %41 = tpu.matmul %37, %39, %cst_11 {dimension_numbers = #tpu.dot_dimension_numbers<[1], [0], [0], [1], [0, 0, 1, 1], [], []>} : vector<16x32xf32>, vector<32x32xf32>, vector<16x32xf32> -> vector<16x32xf32>
    %42 = vector.broadcast %40 : vector<1x32xf32> to vector<16x32xf32>
    %43 = arith.addf %41, %42 : vector<16x32xf32>
    %44 = math.tanh %43 : vector<16x32xf32>
    %45 = arith.mulf %44, %5 : vector<16x32xf32>
    %c256 = arith.constant 256 : index
    %c0_12 = arith.constant 0 : index
    %46 = vector.load %arg2[%c256, %c0_12] : memref<904x128xf32, #tpu.memory_space<vmem>>, vector<32x32xf32>
    %47 = vector.extract_strided_slice %14 {offsets = [4, 0], sizes = [1, 32], strides = [1, 1]} : vector<12x32xf32> to vector<1x32xf32>
    %cst_13 = arith.constant dense<0.000000e+00> : vector<16x32xf32>
    %48 = tpu.matmul %45, %46, %cst_13 {dimension_numbers = #tpu.dot_dimension_numbers<[1], [0], [0], [1], [0, 0, 1, 1], [], []>} : vector<16x32xf32>, vector<32x32xf32>, vector<16x32xf32> -> vector<16x32xf32>
    %49 = vector.broadcast %47 : vector<1x32xf32> to vector<16x32xf32>
    %50 = arith.addf %48, %49 : vector<16x32xf32>
    %51 = math.tanh %50 : vector<16x32xf32>
    %52 = arith.mulf %51, %5 : vector<16x32xf32>
    %53 = arith.addf %45, %52 : vector<16x32xf32>
    %c288 = arith.constant 288 : index
    %c0_14 = arith.constant 0 : index
    %54 = vector.load %arg2[%c288, %c0_14] : memref<904x128xf32, #tpu.memory_space<vmem>>, vector<32x32xf32>
    %55 = vector.extract_strided_slice %14 {offsets = [5, 0], sizes = [1, 32], strides = [1, 1]} : vector<12x32xf32> to vector<1x32xf32>
    %cst_15 = arith.constant dense<0.000000e+00> : vector<16x32xf32>
    %56 = tpu.matmul %52, %54, %cst_15 {dimension_numbers = #tpu.dot_dimension_numbers<[1], [0], [0], [1], [0, 0, 1, 1], [], []>} : vector<16x32xf32>, vector<32x32xf32>, vector<16x32xf32> -> vector<16x32xf32>
    %57 = vector.broadcast %55 : vector<1x32xf32> to vector<16x32xf32>
    %58 = arith.addf %56, %57 : vector<16x32xf32>
    %59 = math.tanh %58 : vector<16x32xf32>
    %60 = arith.mulf %59, %5 : vector<16x32xf32>
    %61 = arith.addf %53, %60 : vector<16x32xf32>
    %c320 = arith.constant 320 : index
    %c0_16 = arith.constant 0 : index
    %62 = vector.load %arg2[%c320, %c0_16] : memref<904x128xf32, #tpu.memory_space<vmem>>, vector<32x32xf32>
    %63 = vector.extract_strided_slice %14 {offsets = [6, 0], sizes = [1, 32], strides = [1, 1]} : vector<12x32xf32> to vector<1x32xf32>
    %cst_17 = arith.constant dense<0.000000e+00> : vector<16x32xf32>
    %64 = tpu.matmul %60, %62, %cst_17 {dimension_numbers = #tpu.dot_dimension_numbers<[1], [0], [0], [1], [0, 0, 1, 1], [], []>} : vector<16x32xf32>, vector<32x32xf32>, vector<16x32xf32> -> vector<16x32xf32>
    %65 = vector.broadcast %63 : vector<1x32xf32> to vector<16x32xf32>
    %66 = arith.addf %64, %65 : vector<16x32xf32>
    %67 = math.tanh %66 : vector<16x32xf32>
    %68 = arith.mulf %67, %5 : vector<16x32xf32>
    %69 = arith.addf %61, %68 : vector<16x32xf32>
    %c352 = arith.constant 352 : index
    %c0_18 = arith.constant 0 : index
    %70 = vector.load %arg2[%c352, %c0_18] : memref<904x128xf32, #tpu.memory_space<vmem>>, vector<32x32xf32>
    %71 = vector.extract_strided_slice %14 {offsets = [7, 0], sizes = [1, 32], strides = [1, 1]} : vector<12x32xf32> to vector<1x32xf32>
    %cst_19 = arith.constant dense<0.000000e+00> : vector<16x32xf32>
    %72 = tpu.matmul %68, %70, %cst_19 {dimension_numbers = #tpu.dot_dimension_numbers<[1], [0], [0], [1], [0, 0, 1, 1], [], []>} : vector<16x32xf32>, vector<32x32xf32>, vector<16x32xf32> -> vector<16x32xf32>
    %73 = vector.broadcast %71 : vector<1x32xf32> to vector<16x32xf32>
    %74 = arith.addf %72, %73 : vector<16x32xf32>
    %75 = math.tanh %74 : vector<16x32xf32>
    %76 = arith.mulf %75, %5 : vector<16x32xf32>
    %c384 = arith.constant 384 : index
    %c0_20 = arith.constant 0 : index
    %77 = vector.load %arg2[%c384, %c0_20] : memref<904x128xf32, #tpu.memory_space<vmem>>, vector<32x32xf32>
    %78 = vector.extract_strided_slice %14 {offsets = [8, 0], sizes = [1, 32], strides = [1, 1]} : vector<12x32xf32> to vector<1x32xf32>
    %cst_21 = arith.constant dense<0.000000e+00> : vector<16x32xf32>
    %79 = tpu.matmul %76, %77, %cst_21 {dimension_numbers = #tpu.dot_dimension_numbers<[1], [0], [0], [1], [0, 0, 1, 1], [], []>} : vector<16x32xf32>, vector<32x32xf32>, vector<16x32xf32> -> vector<16x32xf32>
    %80 = vector.broadcast %78 : vector<1x32xf32> to vector<16x32xf32>
    %81 = arith.addf %79, %80 : vector<16x32xf32>
    %82 = math.tanh %81 : vector<16x32xf32>
    %83 = arith.mulf %82, %5 : vector<16x32xf32>
    %84 = arith.addf %76, %83 : vector<16x32xf32>
    %c416 = arith.constant 416 : index
    %c0_22 = arith.constant 0 : index
    %85 = vector.load %arg2[%c416, %c0_22] : memref<904x128xf32, #tpu.memory_space<vmem>>, vector<32x32xf32>
    %86 = vector.extract_strided_slice %14 {offsets = [9, 0], sizes = [1, 32], strides = [1, 1]} : vector<12x32xf32> to vector<1x32xf32>
    %cst_23 = arith.constant dense<0.000000e+00> : vector<16x32xf32>
    %87 = tpu.matmul %83, %85, %cst_23 {dimension_numbers = #tpu.dot_dimension_numbers<[1], [0], [0], [1], [0, 0, 1, 1], [], []>} : vector<16x32xf32>, vector<32x32xf32>, vector<16x32xf32> -> vector<16x32xf32>
    %88 = vector.broadcast %86 : vector<1x32xf32> to vector<16x32xf32>
    %89 = arith.addf %87, %88 : vector<16x32xf32>
    %90 = math.tanh %89 : vector<16x32xf32>
    %91 = arith.mulf %90, %5 : vector<16x32xf32>
    %92 = arith.addf %84, %91 : vector<16x32xf32>
    %c448 = arith.constant 448 : index
    %c0_24 = arith.constant 0 : index
    %93 = vector.load %arg2[%c448, %c0_24] : memref<904x128xf32, #tpu.memory_space<vmem>>, vector<32x32xf32>
    %94 = vector.extract_strided_slice %14 {offsets = [10, 0], sizes = [1, 32], strides = [1, 1]} : vector<12x32xf32> to vector<1x32xf32>
    %cst_25 = arith.constant dense<0.000000e+00> : vector<16x32xf32>
    %95 = tpu.matmul %91, %93, %cst_25 {dimension_numbers = #tpu.dot_dimension_numbers<[1], [0], [0], [1], [0, 0, 1, 1], [], []>} : vector<16x32xf32>, vector<32x32xf32>, vector<16x32xf32> -> vector<16x32xf32>
    %96 = vector.broadcast %94 : vector<1x32xf32> to vector<16x32xf32>
    %97 = arith.addf %95, %96 : vector<16x32xf32>
    %98 = math.tanh %97 : vector<16x32xf32>
    %99 = arith.mulf %98, %5 : vector<16x32xf32>
    %100 = arith.addf %92, %99 : vector<16x32xf32>
    %cst_26 = arith.constant 2.500000e-01 : f32
    %101 = vector.broadcast %cst_26 : f32 to vector<16x32xf32>
    %102 = arith.mulf %38, %101 : vector<16x32xf32>
    %cst_27 = arith.constant 2.500000e-01 : f32
    %103 = vector.broadcast %cst_27 : f32 to vector<16x32xf32>
    %104 = arith.mulf %69, %103 : vector<16x32xf32>
    %cst_28 = arith.constant 2.500000e-01 : f32
    %105 = vector.broadcast %cst_28 : f32 to vector<16x32xf32>
    %106 = arith.mulf %100, %105 : vector<16x32xf32>
    %107 = tpu.concatenate %102, %104, %106 in 1 : vector<16x32xf32>, vector<16x32xf32>, vector<16x32xf32> -> vector<16x96xf32>
    %c0_29 = arith.constant 0 : index
    %c0_30 = arith.constant 0 : index
    %108 = vector.load %arg1[%c0_29, %c0_30] : memref<8x256xf32, #tpu.memory_space<vmem>>, vector<8x256xf32>
    %cst_31 = arith.constant dense<0.000000e+00> : vector<8xf32>
    %109 = vector.multi_reduction <add>, %108, %cst_31 [1] : vector<8x256xf32> to vector<8xf32>
    %110 = vector.shape_cast %109 : vector<8xf32> to vector<8x1xf32>
    %cst_32 = arith.constant 2.560000e+02 : f32
    %111 = vector.broadcast %cst_32 : f32 to vector<8x1xf32>
    %112 = arith.divf %110, %111 : vector<8x1xf32>
    %c528 = arith.constant 528 : index
    %c0_33 = arith.constant 0 : index
    %113 = vector.load %arg2[%c528, %c0_33] : memref<904x128xf32, #tpu.memory_space<vmem>>, vector<8x32xf32>
    %c536 = arith.constant 536 : index
    %c0_34 = arith.constant 0 : index
    %114 = vector.load %arg2[%c536, %c0_34] : memref<904x128xf32, #tpu.memory_space<vmem>>, vector<1x32xf32>
    %c544 = arith.constant 544 : index
    %c0_35 = arith.constant 0 : index
    %115 = vector.load %arg2[%c544, %c0_35] : memref<904x128xf32, #tpu.memory_space<vmem>>, vector<2x8xf32>
    %116 = vector.broadcast %112 : vector<8x1xf32> to vector<8x32xf32>
    %117 = arith.mulf %116, %113 : vector<8x32xf32>
    %cst_36 = arith.constant dense<0.000000e+00> : vector<2x32xf32>
    %118 = tpu.matmul %115, %117, %cst_36 {dimension_numbers = #tpu.dot_dimension_numbers<[1], [0], [0], [1], [0, 0, 1, 1], [], []>} : vector<2x8xf32>, vector<8x32xf32>, vector<2x32xf32> -> vector<2x32xf32>
    %119 = vector.broadcast %114 : vector<1x32xf32> to vector<2x32xf32>
    %120 = arith.addf %118, %119 : vector<2x32xf32>
    %cst_37 = arith.constant 0.000000e+00 : f32
    %121 = vector.broadcast %cst_37 : f32 to vector<2x32xf32>
    %122 = arith.maximumf %120, %121 : vector<2x32xf32>
    %c552 = arith.constant 552 : index
    %c0_38 = arith.constant 0 : index
    %123 = vector.load %arg2[%c552, %c0_38] : memref<904x128xf32, #tpu.memory_space<vmem>>, vector<32x128xf32>
    %cst_39 = arith.constant dense<0.000000e+00> : vector<2x128xf32>
    %124 = tpu.matmul %122, %123, %cst_39 {dimension_numbers = #tpu.dot_dimension_numbers<[1], [0], [0], [1], [0, 0, 1, 1], [], []>} : vector<2x32xf32>, vector<32x128xf32>, vector<2x128xf32> -> vector<2x128xf32>
    %125 = vector.extract_strided_slice %124 {offsets = [0, 0], sizes = [2, 32], strides = [1, 1]} : vector<2x128xf32> to vector<2x32xf32>
    %126 = vector.extract_strided_slice %124 {offsets = [0, 32], sizes = [2, 96], strides = [1, 1]} : vector<2x128xf32> to vector<2x96xf32>
    %127 = vector.shape_cast %125 : vector<2x32xf32> to vector<2x1x32xf32>
    %128 = vector.shape_cast %127 : vector<2x1x32xf32> to vector<2x1x32xf32>
    %129 = vector.broadcast %128 : vector<2x1x32xf32> to vector<2x8x32xf32>
    %130 = vector.shape_cast %129 : vector<2x8x32xf32> to vector<16x32xf32>
    %131 = tpu.concatenate %130, %130, %130 in 1 : vector<16x32xf32>, vector<16x32xf32>, vector<16x32xf32> -> vector<16x96xf32>
    %c688 = arith.constant 688 : index
    %c0_40 = arith.constant 0 : index
    %132 = vector.load %arg2[%c688, %c0_40] : memref<904x128xf32, #tpu.memory_space<vmem>>, vector<96x3xf32>
    %133 = arith.mulf %107, %131 : vector<16x96xf32>
    %cst_41 = arith.constant dense<0.000000e+00> : vector<16x3xf32>
    %134 = tpu.matmul %133, %132, %cst_41 {dimension_numbers = #tpu.dot_dimension_numbers<[1], [0], [0], [1], [0, 0, 1, 1], [], []>} : vector<16x96xf32>, vector<96x3xf32>, vector<16x3xf32> -> vector<16x3xf32>
    %135 = vector.shape_cast %3 : vector<16x1xf32> to vector<16x1xf32>
    %136 = vector.broadcast %135 : vector<16x1xf32> to vector<16x3xf32>
    %cst_42 = arith.constant 0.000000e+00 : f32
    %137 = vector.broadcast %cst_42 : f32 to vector<16x3xf32>
    %138 = arith.cmpf ogt, %136, %137 : vector<16x3xf32>
    %cst_43 = arith.constant -1.000000e+30 : f32
    %139 = vector.broadcast %cst_43 : f32 to vector<16x3xf32>
    %140 = arith.select %138, %134, %139 : vector<16x3xi1>, vector<16x3xf32>
    %141 = vector.shape_cast %140 : vector<16x3xf32> to vector<2x8x3xf32>
    %cst_44 = arith.constant dense<0xFF800000> : vector<2x3xf32>
    %142 = vector.multi_reduction <maximumf>, %141, %cst_44 [1] : vector<2x8x3xf32> to vector<2x3xf32>
    %143 = vector.shape_cast %142 : vector<2x3xf32> to vector<2x1x3xf32>
    %144 = vector.broadcast %143 : vector<2x1x3xf32> to vector<2x8x3xf32>
    %145 = arith.subf %141, %144 : vector<2x8x3xf32>
    %146 = math.exp %145 : vector<2x8x3xf32>
    %cst_45 = arith.constant dense<0.000000e+00> : vector<2x3xf32>
    %147 = vector.multi_reduction <add>, %146, %cst_45 [1] : vector<2x8x3xf32> to vector<2x3xf32>
    %148 = vector.shape_cast %147 : vector<2x3xf32> to vector<2x1x3xf32>
    %cst_46 = arith.constant 1.000000e-30 : f32
    %149 = vector.broadcast %cst_46 : f32 to vector<2x1x3xf32>
    %150 = arith.maximumf %148, %149 : vector<2x1x3xf32>
    %151 = tpu.reciprocal %150 {approx = true} : vector<2x1x3xf32> -> vector<2x1x3xf32>
    %152 = vector.broadcast %151 : vector<2x1x3xf32> to vector<2x8x3xf32>
    %153 = arith.mulf %146, %152 : vector<2x8x3xf32>
    %154 = vector.shape_cast %153 : vector<2x8x3xf32> to vector<16x3xf32>
    %c784 = arith.constant 784 : index
    %c0_47 = arith.constant 0 : index
    %155 = vector.load %arg2[%c784, %c0_47] : memref<904x128xf32, #tpu.memory_space<vmem>>, vector<3x96xf32>
    %cst_48 = arith.constant dense<0.000000e+00> : vector<16x96xf32>
    %156 = tpu.matmul %154, %155, %cst_48 {dimension_numbers = #tpu.dot_dimension_numbers<[1], [0], [0], [1], [0, 0, 1, 1], [], []>} : vector<16x3xf32>, vector<3x96xf32>, vector<16x96xf32> -> vector<16x96xf32>
    %c792 = arith.constant 792 : index
    %c0_49 = arith.constant 0 : index
    %157 = vector.load %arg2[%c792, %c0_49] : memref<904x128xf32, #tpu.memory_space<vmem>>, vector<2x16xf32>
    %158 = arith.mulf %156, %107 : vector<16x96xf32>
    %cst_50 = arith.constant dense<0.000000e+00> : vector<2x96xf32>
    %159 = tpu.matmul %157, %158, %cst_50 {dimension_numbers = #tpu.dot_dimension_numbers<[1], [0], [0], [1], [0, 0, 1, 1], [], []>} : vector<2x16xf32>, vector<16x96xf32>, vector<2x96xf32> -> vector<2x96xf32>
    %c584 = arith.constant 584 : index
    %c0_51 = arith.constant 0 : index
    %160 = vector.load %arg2[%c584, %c0_51] : memref<904x128xf32, #tpu.memory_space<vmem>>, vector<96x96xf32>
    %c680 = arith.constant 680 : index
    %c0_52 = arith.constant 0 : index
    %161 = vector.load %arg2[%c680, %c0_52] : memref<904x128xf32, #tpu.memory_space<vmem>>, vector<1x96xf32>
    %cst_53 = arith.constant dense<0.000000e+00> : vector<2x96xf32>
    %162 = tpu.matmul %159, %160, %cst_53 {dimension_numbers = #tpu.dot_dimension_numbers<[1], [0], [0], [1], [0, 0, 1, 1], [], []>} : vector<2x96xf32>, vector<96x96xf32>, vector<2x96xf32> -> vector<2x96xf32>
    %163 = arith.addf %162, %126 : vector<2x96xf32>
    %164 = vector.broadcast %161 : vector<1x96xf32> to vector<2x96xf32>
    %165 = arith.addf %163, %164 : vector<2x96xf32>
    %cst_54 = arith.constant 0.000000e+00 : f32
    %166 = vector.broadcast %cst_54 : f32 to vector<2x96xf32>
    %167 = arith.maximumf %165, %166 : vector<2x96xf32>
    %c800 = arith.constant 800 : index
    %c0_55 = arith.constant 0 : index
    %168 = vector.load %arg2[%c800, %c0_55] : memref<904x128xf32, #tpu.memory_space<vmem>>, vector<96x2xf32>
    %c896 = arith.constant 896 : index
    %c0_56 = arith.constant 0 : index
    %169 = vector.load %arg2[%c896, %c0_56] : memref<904x128xf32, #tpu.memory_space<vmem>>, vector<1x2xf32>
    %cst_57 = arith.constant dense<0.000000e+00> : vector<2x2xf32>
    %170 = tpu.matmul %167, %168, %cst_57 {dimension_numbers = #tpu.dot_dimension_numbers<[1], [0], [0], [1], [0, 0, 1, 1], [], []>} : vector<2x96xf32>, vector<96x2xf32>, vector<2x2xf32> -> vector<2x2xf32>
    %171 = vector.broadcast %169 : vector<1x2xf32> to vector<2x2xf32>
    %172 = arith.addf %170, %171 : vector<2x2xf32>
    %c0_58 = arith.constant 0 : index
    %c0_59 = arith.constant 0 : index
    %173 = vector.load %arg3[%c0_58, %c0_59] : memref<2x2xf32, #tpu.memory_space<vmem>>, vector<2x2xf32>
    tpu.vector_store %arg3[%c0_58, %c0_59], %172 {strides = array<i32>} : memref<2x2xf32, #tpu.memory_space<vmem>>, vector<2x2xf32>,
    return
  }
}

</mosaic_0001>

<llo_original>
// kernel: hierarchical_encoding_network.1
$region0: #{hierarchical_encoding_network.1}
  #allocation0 [shape = 'u32[]', space=smem, size = 0x4, offset = 0x4, fixed_abs, tag = 'smem constant byte address 0x4 - core index']
  #allocation1 [shape = 'u32[144,128]{1,0:T(1,128)}', space=vmem, size = 0x12000, scoped, tag = 'internal scratch']
  %s0 = inlined_call_operand.vmem [shape: f32[16,2], index: 0, kind: input, shape index: {}]
  %s1 = inlined_call_operand.vmem [shape: f32[8,256], index: 1, kind: input, shape index: {}]
  %s2 = inlined_call_operand.hbm [shape: f32[904,128], index: 2, kind: input, shape index: {}]
  %s3 = inlined_call_operand.hbm [shape: f32[2,2], index: 3, kind: output, shape index: {}]
  %s4 = sld [smem:[#allocation0]]
  $region26: #{hierarchical_encoding_network.1} parent=0
    _
  %s6 = ssub.s32 1, %s4
  %s7 = scalar_select 0, %s6, %s4
  $region1: #{hierarchical_encoding_network.1} parent=0
    #allocation2 [shape = 'u8[462848]{0}', space=vmem, size = 0x71000, scoped, tag = 'input window, operand 2, single buffered']
    #allocation3 [shape = 's32[1]{0}', space=sflag, size = 0x4, scoped, tag = 'scoped memory for hierarchical_encoding_network.1']
    #allocation4 [shape = 's32[1]{0}', space=sflag, size = 0x4, scoped, tag = 'scoped memory for hierarchical_encoding_network.1']
    #allocation5 [shape = 'u8[1024]{0}', space=vmem, size = 0x400, scoped, tag = 'output window, operand 0, single buffered']
    %8 = vsyncpa [#allocation3], 0
    %9 = vsyncpa [#allocation4], 0
    // Predicated region
    $region2: #{hierarchical_encoding_network.1} parent=1 // pred_check
      _
    $region3: #{hierarchical_encoding_network.1} parent=1 // pred_check_branch
      %11 = sbr.rel (0) target = $region5
    $region4: #{hierarchical_encoding_network.1} parent=1 // pred_region
      _
    $region5: #{hierarchical_encoding_network.1} parent=1 // pred_fallthru
      _
    // Predicated region
    $region6: #{hierarchical_encoding_network.1} parent=1 // pred_check
      _
    $region7: #{hierarchical_encoding_network.1} parent=1 // pred_check_branch
      %13 = sbr.rel (0) target = $region9
    $region8: #{hierarchical_encoding_network.1} parent=1 // pred_region
      _
    $region9: #{hierarchical_encoding_network.1} parent=1 // pred_fallthru
      _
    // Predicated region
    $region10: #{hierarchical_encoding_network.1} parent=1 // pred_check
      _
    $region11: #{hierarchical_encoding_network.1} parent=1 // pred_check_branch
      %15 = sbr.rel (0) target = $region13
    $region12: #{hierarchical_encoding_network.1} parent=1 // pred_region
      %s17 = ssub.s32 14464, 14464
      %18 = vsyncadd [#allocation3], %s17
      %s19 = sshll.u32 [#allocation2], 4
      %s20 = int_to_ptr.vmem [resolvable:$true] %s19
      %25 = dma.hbm_to_vmem [thread:$0]  %s2, 14464, %s20, [#allocation3], 128, 128, 8
    $region13: #{hierarchical_encoding_network.1} parent=1 // pred_fallthru
      _
    // Predicated region
    $region14: #{hierarchical_encoding_network.1} parent=1 // pred_check
      _
    $region15: #{hierarchical_encoding_network.1} parent=1 // pred_check_branch
      %27 = sbr.rel (0) target = $region17
    $region16: #{hierarchical_encoding_network.1} parent=1 // pred_region
      %28 = dma.done [#allocation3], 14464
    $region17: #{hierarchical_encoding_network.1} parent=1 // pred_fallthru
      _
    %v29 = vld [vmem:[%s0] sm:$0xff]
    %v30 = vld [vmem:[%s0 + $0x8] sm:$0xff]
    %v31 = vcvt.f32.s32.to.zero.pseudo %v29
    %v32 = vcvt.f32.s32.to.zero.pseudo %v30
    %34 = vset.pattern.permute.xlu0 1
    %35 = vperm.xlu0 %34, %v29
    %v36 = vpop.permute.xlu0 %35
    %39 = vset.pattern.permute.xlu0 1
    %40 = vperm.xlu0 %39, %v30
    %v41 = vpop.permute.xlu0 %40
    %v43 = vlaneseq
    %v44 = vand.u32 %v43, 127
    %45 = vset.pattern.permute.xlu0 0
    %46 = vperm.xlu0 %45, %v31
    %v47 = vpop.permute.xlu0 %46
    %48 = vset.pattern.permute.xlu0 0
    %49 = vperm.xlu0 %48, %v32
    %v50 = vpop.permute.xlu0 %49
    %vm51 = vcmp.eq.s32.totalorder %v47, %v44
    %vm52 = vcmp.eq.s32.totalorder %v50, %v44
    %v53 = vsel %vm51, 1, 0
    %v54 = vsel %vm52, 1, 0
    %v55 = vcvt.s32.f32 %v53
    %v56 = vcvt.s32.f32 %v54
    %v57 = vld [vmem:[#allocation2] sm:$0xff]
    %v58 = vld [vmem:[#allocation2 + $0x8] sm:$0xff]
    %v59 = vld [vmem:[#allocation2 + $0x10] sm:$0xff]
    %v60 = vld [vmem:[#allocation2 + $0x18] sm:$0xff]
    %v61 = vld [vmem:[#allocation2 + $0x20] sm:$0xff]
    %v62 = vld [vmem:[#allocation2 + $0x28] sm:$0xff]
    %v63 = vld [vmem:[#allocation2 + $0x30] sm:$0xff]
    %v64 = vld [vmem:[#allocation2 + $0x38] sm:$0xff]
    %v65 = vld [vmem:[#allocation2 + $0x40] sm:$0xff]
    %v66 = vld [vmem:[#allocation2 + $0x48] sm:$0xff]
    %v67 = vld [vmem:[#allocation2 + $0x50] sm:$0xff]
    %v68 = vld [vmem:[#allocation2 + $0x58] sm:$0xff]
    %v69 = vld [vmem:[#allocation2 + $0x60] sm:$0xff]
    %v70 = vld [vmem:[#allocation2 + $0x68] sm:$0xff]
    %v71 = vld [vmem:[#allocation2 + $0x70] sm:$0xff]
    %v72 = vld [vmem:[#allocation2 + $0x78] sm:$0xff]
    %73 = vmatprep.subr.mxu0 0.0
    %74 = vmatpush1.msra.mxu0 %v57
    %75 = vmatprep.subr.mxu0 0.0
    %76 = vmatpush1.msra.mxu0 %v58
    %77 = vmatprep.subr.mxu0 0.0
    %78 = vmatpush1.msra.mxu0 %v59
    %79 = vmatprep.subr.mxu0 0.0
    %80 = vmatpush1.msra.mxu0 %v60
    %81 = vmatprep.subr.mxu0 0.0
    %82 = vmatpush1.msra.mxu0 %v61
    %83 = vmatprep.subr.mxu0 0.0
    %84 = vmatpush1.msra.mxu0 %v62
    %85 = vmatprep.subr.mxu0 0.0
    %86 = vmatpush1.msra.mxu0 %v63
    %87 = vmatprep.subr.mxu0 0.0
    %88 = vmatpush1.msra.mxu0 %v64
    %89 = vmatprep.subr.mxu0 0.0
    %90 = vmatpush1.msra.mxu0 %v65
    %91 = vmatprep.subr.mxu0 0.0
    %92 = vmatpush1.msra.mxu0 %v66
    %93 = vmatprep.subr.mxu0 0.0
    %94 = vmatpush1.msra.mxu0 %v67
    %95 = vmatprep.subr.mxu0 0.0
    %96 = vmatpush1.msra.mxu0 %v68
    %97 = vmatprep.subr.mxu0 0.0
    %98 = vmatpush1.msra.mxu0 %v69
    %99 = vmatprep.subr.mxu0 0.0
    %100 = vmatpush1.msra.mxu0 %v70
    %101 = vmatprep.subr.mxu0 0.0
    %102 = vmatpush1.msra.mxu0 %v71
    %103 = vmatprep.subr.mxu0 0.0
    %104 = vmatpush1.msra.mxu0 %v72
    %105 = vmatprep.subr.mxu0 0.0
    %106 = vmatpush1.msra.mxu0 0.0
    %107 = vmatprep.subr.mxu0 0.0
    %108 = vmatpush1.msra.mxu0 0.0
    %109 = vmatprep.subr.mxu0 0.0
    %110 = vmatpush1.msra.mxu0 0.0
    %111 = vmatprep.subr.mxu0 0.0
    %112 = vmatpush1.msra.mxu0 0.0
    %113 = vmatprep.subr.mxu0 0.0
    %114 = vmatpush1.msra.mxu0 0.0
    %115 = vmatprep.subr.mxu0 0.0
    %116 = vmatpush1.msra.mxu0 0.0
    %117 = vmatprep.subr.mxu0 0.0
    %118 = vmatpush1.msra.mxu0 0.0
    %119 = vmatprep.subr.mxu0 0.0
    %120 = vmatpush1.msra.mxu0 0.0
    %121 = vmatprep.subr.mxu0 0.0
    %122 = vmatpush1.msra.mxu0 0.0
    %123 = vmatprep.subr.mxu0 0.0
    %124 = vmatpush1.msra.mxu0 0.0
    %125 = vmatprep.subr.mxu0 0.0
    %126 = vmatpush1.msra.mxu0 0.0
    %127 = vmatprep.subr.mxu0 0.0
    %128 = vmatpush1.msra.mxu0 0.0
    %129 = vmatprep.subr.mxu0 0.0
    %130 = vmatpush1.msra.mxu0 0.0
    %131 = vmatprep.subr.mxu0 0.0
    %132 = vmatpush1.msra.mxu0 0.0
    %133 = vmatprep.subr.mxu0 0.0
    %134 = vmatpush1.msra.mxu0 0.0
    %135 = vmatprep.subr.mxu0 0.0
    %136 = vmatpush1.msra.mxu0 0.0
    %137 = vmatprep.mubr.f32.mxu0 0.0
    %138 = vmatmul.mubr.f32.gmra.mrb[0].mxu0 %v55
    %v139 = vpop.f32.mrb[0].mxu0
    %v140 = vadd.f32 0.0, %v139
    %v141 = vpop.f32.mrb[0].mxu0
    %142 = vmatprep.mubr.f32.mxu0 0.0
    %143 = vmatmul.mubr.f32.gmra.mrb[0].mxu0 %v56
    %v144 = vpop.f32.mrb[0].mxu0
    %v145 = vadd.f32 0.0, %v144
    %v146 = vpop.f32.mrb[0].mxu0
    %147 = vdwg.mxu0
    %v148 = vmul.f32 %v140, %v36
    %v149 = vmul.f32 %v145, %v41
    %v150 = vld [vmem:[#allocation2 + $0x200] sm:$0xff]
    %v151 = vld [vmem:[#allocation2 + $0x208] sm:$0xf]
    %v152 = vld [vmem:[#allocation2 + $0x80] sm:$0xff]
    %v153 = vld [vmem:[#allocation2 + $0x88] sm:$0xff]
    %v154 = vld [vmem:[#allocation2 + $0x90] sm:$0xff]
    %v155 = vld [vmem:[#allocation2 + $0x98] sm:$0xff]
    %v156 = vlaneseq
    %v157 = vshrl.u32 %v156, 7
    %v158 = vsub.s32 0, %v157
    %v159 = vrot.slane %v150, %v158
    %vm160 = vcmask 261120
    %v162 = vsel %vm160, %v148, 0
    %v165 = vsel %vm160, %v149, 0
    %167 = vmatprep.subr.mxu0 0.0
    %168 = vmatpush1.msra.mxu0 %v152
    %169 = vmatprep.subr.mxu0 0.0
    %170 = vmatpush1.msra.mxu0 %v153
    %171 = vmatprep.subr.mxu0 0.0
    %172 = vmatpush1.msra.mxu0 %v154
    %173 = vmatprep.subr.mxu0 0.0
    %174 = vmatpush1.msra.mxu0 %v155
    %175 = vmatprep.subr.mxu0 0.0
    %176 = vmatpush1.msra.mxu0 0.0
    %177 = vmatprep.subr.mxu0 0.0
    %178 = vmatpush1.msra.mxu0 0.0
    %179 = vmatprep.subr.mxu0 0.0
    %180 = vmatpush1.msra.mxu0 0.0
    %181 = vmatprep.subr.mxu0 0.0
    %182 = vmatpush1.msra.mxu0 0.0
    %183 = vmatprep.subr.mxu0 0.0
    %184 = vmatpush1.msra.mxu0 0.0
    %185 = vmatprep.subr.mxu0 0.0
    %186 = vmatpush1.msra.mxu0 0.0
    %187 = vmatprep.subr.mxu0 0.0
    %188 = vmatpush1.msra.mxu0 0.0
    %189 = vmatprep.subr.mxu0 0.0
    %190 = vmatpush1.msra.mxu0 0.0
    %191 = vmatprep.subr.mxu0 0.0
    %192 = vmatpush1.msra.mxu0 0.0
    %193 = vmatprep.subr.mxu0 0.0
    %194 = vmatpush1.msra.mxu0 0.0
    %195 = vmatprep.subr.mxu0 0.0
    %196 = vmatpush1.msra.mxu0 0.0
    %197 = vmatprep.subr.mxu0 0.0
    %198 = vmatpush1.msra.mxu0 0.0
    %199 = vmatprep.subr.mxu0 0.0
    %200 = vmatpush1.msra.mxu0 0.0
    %201 = vmatprep.subr.mxu0 0.0
    %202 = vmatpush1.msra.mxu0 0.0
    %203 = vmatprep.subr.mxu0 0.0
    %204 = vmatpush1.msra.mxu0 0.0
    %205 = vmatprep.subr.mxu0 0.0
    %206 = vmatpush1.msra.mxu0 0.0
    %207 = vmatprep.subr.mxu0 0.0
    %208 = vmatpush1.msra.mxu0 0.0
    %209 = vmatprep.subr.mxu0 0.0
    %210 = vmatpush1.msra.mxu0 0.0
    %211 = vmatprep.subr.mxu0 0.0
    %212 = vmatpush1.msra.mxu0 0.0
    %213 = vmatprep.subr.mxu0 0.0
    %214 = vmatpush1.msra.mxu0 0.0
    %215 = vmatprep.subr.mxu0 0.0
    %216 = vmatpush1.msra.mxu0 0.0
    %217 = vmatprep.subr.mxu0 0.0
    %218 = vmatpush1.msra.mxu0 0.0
    %219 = vmatprep.subr.mxu0 0.0
    %220 = vmatpush1.msra.mxu0 0.0
    %221 = vmatprep.subr.mxu0 0.0
    %222 = vmatpush1.msra.mxu0 0.0
    %223 = vmatprep.subr.mxu0 0.0
    %224 = vmatpush1.msra.mxu0 0.0
    %225 = vmatprep.subr.mxu0 0.0
    %226 = vmatpush1.msra.mxu0 0.0
    %227 = vmatprep.subr.mxu0 0.0
    %228 = vmatpush1.msra.mxu0 0.0
    %229 = vmatprep.subr.mxu0 0.0
    %230 = vmatpush1.msra.mxu0 0.0
    %231 = vmatprep.mubr.f32.mxu0 0.0
    %232 = vmatmul.mubr.f32.gmra.mrb[0].mxu0 %v162
    %v233 = vpop.f32.mrb[0].mxu0
    %v234 = vadd.f32 %v159, %v233
    %v235 = vpop.f32.mrb[0].mxu0
    %236 = vmatprep.mubr.f32.mxu0 0.0
    %237 = vmatmul.mubr.f32.gmra.mrb[0].mxu0 %v165
    %v238 = vpop.f32.mrb[0].mxu0
    %v239 = vadd.f32 %v159, %v238
    %v240 = vpop.f32.mrb[0].mxu0
    %241 = vdwg.mxu0
    %v242 = vtanh.pop %v234
    %v243 = vtanh.pop %v239
    %v244 = vmul.f32 %v242, %v36
    %v245 = vmul.f32 %v243, %v41
    %v246 = vadd.f32 %v148, %v244
    %v247 = vadd.f32 %v149, %v245
    %v248 = vld [vmem:[#allocation2 + $0xa0] sm:$0xff]
    %v249 = vld [vmem:[#allocation2 + $0xa8] sm:$0xff]
    %v250 = vld [vmem:[#allocation2 + $0xb0] sm:$0xff]
    %v251 = vld [vmem:[#allocation2 + $0xb8] sm:$0xff]
    %v252 = vlaneseq
    %v253 = vshrl.u32 %v252, 7
    %v254 = vsub.s32 1, %v253
    %v255 = vrot.slane %v150, %v254
    %v257 = vsel %vm160, %v244, 0
    %v260 = vsel %vm160, %v245, 0
    %262 = vmatprep.subr.mxu0 0.0
    %263 = vmatpush1.msra.mxu0 %v248
    %264 = vmatprep.subr.mxu0 0.0
    %265 = vmatpush1.msra.mxu0 %v249
    %266 = vmatprep.subr.mxu0 0.0
    %267 = vmatpush1.msra.mxu0 %v250
    %268 = vmatprep.subr.mxu0 0.0
    %269 = vmatpush1.msra.mxu0 %v251
    %270 = vmatprep.subr.mxu0 0.0
    %271 = vmatpush1.msra.mxu0 0.0
    %272 = vmatprep.subr.mxu0 0.0
    %273 = vmatpush1.msra.mxu0 0.0
    %274 = vmatprep.subr.mxu0 0.0
    %275 = vmatpush1.msra.mxu0 0.0
    %276 = vmatprep.subr.mxu0 0.0
    %277 = vmatpush1.msra.mxu0 0.0
    %278 = vmatprep.subr.mxu0 0.0
    %279 = vmatpush1.msra.mxu0 0.0
    %280 = vmatprep.subr.mxu0 0.0
    %281 = vmatpush1.msra.mxu0 0.0
    %282 = vmatprep.subr.mxu0 0.0
    %283 = vmatpush1.msra.mxu0 0.0
    %284 = vmatprep.subr.mxu0 0.0
    %285 = vmatpush1.msra.mxu0 0.0
    %286 = vmatprep.subr.mxu0 0.0
    %287 = vmatpush1.msra.mxu0 0.0
    %288 = vmatprep.subr.mxu0 0.0
    %289 = vmatpush1.msra.mxu0 0.0
    %290 = vmatprep.subr.mxu0 0.0
    %291 = vmatpush1.msra.mxu0 0.0
    %292 = vmatprep.subr.mxu0 0.0
    %293 = vmatpush1.msra.mxu0 0.0
    %294 = vmatprep.subr.mxu0 0.0
    %295 = vmatpush1.msra.mxu0 0.0
    %296 = vmatprep.subr.mxu0 0.0
    %297 = vmatpush1.msra.mxu0 0.0
    %298 = vmatprep.subr.mxu0 0.0
    %299 = vmatpush1.msra.mxu0 0.0
    %300 = vmatprep.subr.mxu0 0.0
    %301 = vmatpush1.msra.mxu0 0.0
    %302 = vmatprep.subr.mxu0 0.0
    %303 = vmatpush1.msra.mxu0 0.0
    %304 = vmatprep.subr.mxu0 0.0
    %305 = vmatpush1.msra.mxu0 0.0
    %306 = vmatprep.subr.mxu0 0.0
    %307 = vmatpush1.msra.mxu0 0.0
    %308 = vmatprep.subr.mxu0 0.0
    %309 = vmatpush1.msra.mxu0 0.0
    %310 = vmatprep.subr.mxu0 0.0
    %311 = vmatpush1.msra.mxu0 0.0
    %312 = vmatprep.subr.mxu0 0.0
    %313 = vmatpush1.msra.mxu0 0.0
    %314 = vmatprep.subr.mxu0 0.0
    %315 = vmatpush1.msra.mxu0 0.0
    %316 = vmatprep.subr.mxu0 0.0
    %317 = vmatpush1.msra.mxu0 0.0
    %318 = vmatprep.subr.mxu0 0.0
    %319 = vmatpush1.msra.mxu0 0.0
    %320 = vmatprep.subr.mxu0 0.0
    %321 = vmatpush1.msra.mxu0 0.0
    %322 = vmatprep.subr.mxu0 0.0
    %323 = vmatpush1.msra.mxu0 0.0
    %324 = vmatprep.subr.mxu0 0.0
    %325 = vmatpush1.msra.mxu0 0.0
    %326 = vmatprep.mubr.f32.mxu0 0.0
    %327 = vmatmul.mubr.f32.gmra.mrb[0].mxu0 %v257
    %v328 = vpop.f32.mrb[0].mxu0
    %v329 = vadd.f32 %v255, %v328
    %v330 = vpop.f32.mrb[0].mxu0
    %331 = vmatprep.mubr.f32.mxu0 0.0
    %332 = vmatmul.mubr.f32.gmra.mrb[0].mxu0 %v260
    %v333 = vpop.f32.mrb[0].mxu0
    %v334 = vadd.f32 %v255, %v333
    %v335 = vpop.f32.mrb[0].mxu0
    %336 = vdwg.mxu0
    %v337 = vtanh.pop %v329
    %v338 = vtanh.pop %v334
    %v339 = vmul.f32 %v337, %v36
    %v340 = vmul.f32 %v338, %v41
    %v341 = vadd.f32 %v246, %v339
    %v342 = vadd.f32 %v247, %v340
    %v343 = vld [vmem:[#allocation2 + $0xc0] sm:$0xff]
    %v344 = vld [vmem:[#allocation2 + $0xc8] sm:$0xff]
    %v345 = vld [vmem:[#allocation2 + $0xd0] sm:$0xff]
    %v346 = vld [vmem:[#allocation2 + $0xd8] sm:$0xff]
    %v347 = vlaneseq
    %v348 = vshrl.u32 %v347, 7
    %v349 = vsub.s32 2, %v348
    %v350 = vrot.slane %v150, %v349
    %v352 = vsel %vm160, %v339, 0
    %v355 = vsel %vm160, %v340, 0
    %357 = vmatprep.subr.mxu0 0.0
    %358 = vmatpush1.msra.mxu0 %v343
    %359 = vmatprep.subr.mxu0 0.0
    %360 = vmatpush1.msra.mxu0 %v344
    %361 = vmatprep.subr.mxu0 0.0
    %362 = vmatpush1.msra.mxu0 %v345
    %363 = vmatprep.subr.mxu0 0.0
    %364 = vmatpush1.msra.mxu0 %v346
    %365 = vmatprep.subr.mxu0 0.0
    %366 = vmatpush1.msra.mxu0 0.0
    %367 = vmatprep.subr.mxu0 0.0
    %368 = vmatpush1.msra.mxu0 0.0
    %369 = vmatprep.subr.mxu0 0.0
    %370 = vmatpush1.msra.mxu0 0.0
    %371 = vmatprep.subr.mxu0 0.0
    %372 = vmatpush1.msra.mxu0 0.0
    %373 = vmatprep.subr.mxu0 0.0
    %374 = vmatpush1.msra.mxu0 0.0
    %375 = vmatprep.subr.mxu0 0.0
    %376 = vmatpush1.msra.mxu0 0.0
    %377 = vmatprep.subr.mxu0 0.0
    %378 = vmatpush1.msra.mxu0 0.0
    %379 = vmatprep.subr.mxu0 0.0
    %380 = vmatpush1.msra.mxu0 0.0
    %381 = vmatprep.subr.mxu0 0.0
    %382 = vmatpush1.msra.mxu0 0.0
    %383 = vmatprep.subr.mxu0 0.0
    %384 = vmatpush1.msra.mxu0 0.0
    %385 = vmatprep.subr.mxu0 0.0
    %386 = vmatpush1.msra.mxu0 0.0
    %387 = vmatprep.subr.mxu0 0.0
    %388 = vmatpush1.msra.mxu0 0.0
    %389 = vmatprep.subr.mxu0 0.0
    %390 = vmatpush1.msra.mxu0 0.0
    %391 = vmatprep.subr.mxu0 0.0
    %392 = vmatpush1.msra.mxu0 0.0
    %393 = vmatprep.subr.mxu0 0.0
    %394 = vmatpush1.msra.mxu0 0.0
    %395 = vmatprep.subr.mxu0 0.0
    %396 = vmatpush1.msra.mxu0 0.0
    %397 = vmatprep.subr.mxu0 0.0
    %398 = vmatpush1.msra.mxu0 0.0
    %399 = vmatprep.subr.mxu0 0.0
    %400 = vmatpush1.msra.mxu0 0.0
    %401 = vmatprep.subr.mxu0 0.0
    %402 = vmatpush1.msra.mxu0 0.0
    %403 = vmatprep.subr.mxu0 0.0
    %404 = vmatpush1.msra.mxu0 0.0
    %405 = vmatprep.subr.mxu0 0.0
    %406 = vmatpush1.msra.mxu0 0.0
    %407 = vmatprep.subr.mxu0 0.0
    %408 = vmatpush1.msra.mxu0 0.0
    %409 = vmatprep.subr.mxu0 0.0
    %410 = vmatpush1.msra.mxu0 0.0
    %411 = vmatprep.subr.mxu0 0.0
    %412 = vmatpush1.msra.mxu0 0.0
    %413 = vmatprep.subr.mxu0 0.0
    %414 = vmatpush1.msra.mxu0 0.0
    %415 = vmatprep.subr.mxu0 0.0
    %416 = vmatpush1.msra.mxu0 0.0
    %417 = vmatprep.subr.mxu0 0.0
    %418 = vmatpush1.msra.mxu0 0.0
    %419 = vmatprep.subr.mxu0 0.0
    %420 = vmatpush1.msra.mxu0 0.0
    %421 = vmatprep.mubr.f32.mxu0 0.0
    %422 = vmatmul.mubr.f32.gmra.mrb[0].mxu0 %v352
    %v423 = vpop.f32.mrb[0].mxu0
    %v424 = vadd.f32 %v350, %v423
    %v425 = vpop.f32.mrb[0].mxu0
    %426 = vmatprep.mubr.f32.mxu0 0.0
    %427 = vmatmul.mubr.f32.gmra.mrb[0].mxu0 %v355
    %v428 = vpop.f32.mrb[0].mxu0
    %v429 = vadd.f32 %v350, %v428
    %v430 = vpop.f32.mrb[0].mxu0
    %431 = vdwg.mxu0
    %v432 = vtanh.pop %v424
    %v433 = vtanh.pop %v429
    %v434 = vmul.f32 %v432, %v36
    %v435 = vmul.f32 %v433, %v41
    %v436 = vadd.f32 %v341, %v434
    %v437 = vadd.f32 %v342, %v435
    %v438 = vld [vmem:[#allocation2 + $0xe0] sm:$0xff]
    %v439 = vld [vmem:[#allocation2 + $0xe8] sm:$0xff]
    %v440 = vld [vmem:[#allocation2 + $0xf0] sm:$0xff]
    %v441 = vld [vmem:[#allocation2 + $0xf8] sm:$0xff]
    %v442 = vlaneseq
    %v443 = vshrl.u32 %v442, 7
    %v444 = vsub.s32 3, %v443
    %v445 = vrot.slane %v150, %v444
    %v447 = vsel %vm160, %v434, 0
    %v450 = vsel %vm160, %v435, 0
    %452 = vmatprep.subr.mxu0 0.0
    %453 = vmatpush1.msra.mxu0 %v438
    %454 = vmatprep.subr.mxu0 0.0
    %455 = vmatpush1.msra.mxu0 %v439
    %456 = vmatprep.subr.mxu0 0.0
    %457 = vmatpush1.msra.mxu0 %v440
    %458 = vmatprep.subr.mxu0 0.0
    %459 = vmatpush1.msra.mxu0 %v441
    %460 = vmatprep.subr.mxu0 0.0
    %461 = vmatpush1.msra.mxu0 0.0
    %462 = vmatprep.subr.mxu0 0.0
    %463 = vmatpush1.msra.mxu0 0.0
    %464 = vmatprep.subr.mxu0 0.0
    %465 = vmatpush1.msra.mxu0 0.0
    %466 = vmatprep.subr.mxu0 0.0
    %467 = vmatpush1.msra.mxu0 0.0
    %468 = vmatprep.subr.mxu0 0.0
    %469 = vmatpush1.msra.mxu0 0.0
    %470 = vmatprep.subr.mxu0 0.0
    %471 = vmatpush1.msra.mxu0 0.0
    %472 = vmatprep.subr.mxu0 0.0
    %473 = vmatpush1.msra.mxu0 0.0
    %474 = vmatprep.subr.mxu0 0.0
    %475 = vmatpush1.msra.mxu0 0.0
    %476 = vmatprep.subr.mxu0 0.0
    %477 = vmatpush1.msra.mxu0 0.0
    %478 = vmatprep.subr.mxu0 0.0
    %479 = vmatpush1.msra.mxu0 0.0
    %480 = vmatprep.subr.mxu0 0.0
    %481 = vmatpush1.msra.mxu0 0.0
    %482 = vmatprep.subr.mxu0 0.0
    %483 = vmatpush1.msra.mxu0 0.0
    %484 = vmatprep.subr.mxu0 0.0
    %485 = vmatpush1.msra.mxu0 0.0
    %486 = vmatprep.subr.mxu0 0.0
    %487 = vmatpush1.msra.mxu0 0.0
    %488 = vmatprep.subr.mxu0 0.0
    %489 = vmatpush1.msra.mxu0 0.0
    %490 = vmatprep.subr.mxu0 0.0
    %491 = vmatpush1.msra.mxu0 0.0
    %492 = vmatprep.subr.mxu0 0.0
    %493 = vmatpush1.msra.mxu0 0.0
    %494 = vmatprep.subr.mxu0 0.0
    %495 = vmatpush1.msra.mxu0 0.0
    %496 = vmatprep.subr.mxu0 0.0
    %497 = vmatpush1.msra.mxu0 0.0
    %498 = vmatprep.subr.mxu0 0.0
    %499 = vmatpush1.msra.mxu0 0.0
    %500 = vmatprep.subr.mxu0 0.0
    %501 = vmatpush1.msra.mxu0 0.0
    %502 = vmatprep.subr.mxu0 0.0
    %503 = vmatpush1.msra.mxu0 0.0
    %504 = vmatprep.subr.mxu0 0.0
    %505 = vmatpush1.msra.mxu0 0.0
    %506 = vmatprep.subr.mxu0 0.0
    %507 = vmatpush1.msra.mxu0 0.0
    %508 = vmatprep.subr.mxu0 0.0
    %509 = vmatpush1.msra.mxu0 0.0
    %510 = vmatprep.subr.mxu0 0.0
    %511 = vmatpush1.msra.mxu0 0.0
    %512 = vmatprep.subr.mxu0 0.0
    %513 = vmatpush1.msra.mxu0 0.0
    %514 = vmatprep.subr.mxu0 0.0
    %515 = vmatpush1.msra.mxu0 0.0
    %516 = vmatprep.mubr.f32.mxu0 0.0
    %517 = vmatmul.mubr.f32.gmra.mrb[0].mxu0 %v447
    %v518 = vpop.f32.mrb[0].mxu0
    %v519 = vadd.f32 %v445, %v518
    %v520 = vpop.f32.mrb[0].mxu0
    %521 = vmatprep.mubr.f32.mxu0 0.0
    %522 = vmatmul.mubr.f32.gmra.mrb[0].mxu0 %v450
    %v523 = vpop.f32.mrb[0].mxu0
    %v524 = vadd.f32 %v445, %v523
    %v525 = vpop.f32.mrb[0].mxu0
    %526 = vdwg.mxu0
    %v527 = vtanh.pop %v519
    %v528 = vtanh.pop %v524
    %v529 = vmul.f32 %v527, %v36
    %v530 = vmul.f32 %v528, %v41
    %v531 = vld [vmem:[#allocation2 + $0x100] sm:$0xff]
    %v532 = vld [vmem:[#allocation2 + $0x108] sm:$0xff]
    %v533 = vld [vmem:[#allocation2 + $0x110] sm:$0xff]
    %v534 = vld [vmem:[#allocation2 + $0x118] sm:$0xff]
    %v535 = vlaneseq
    %v536 = vshrl.u32 %v535, 7
    %v537 = vsub.s32 4, %v536
    %v538 = vrot.slane %v150, %v537
    %v540 = vsel %vm160, %v529, 0
    %v543 = vsel %vm160, %v530, 0
    %545 = vmatprep.subr.mxu0 0.0
    %546 = vmatpush1.msra.mxu0 %v531
    %547 = vmatprep.subr.mxu0 0.0
    %548 = vmatpush1.msra.mxu0 %v532
    %549 = vmatprep.subr.mxu0 0.0
    %550 = vmatpush1.msra.mxu0 %v533
    %551 = vmatprep.subr.mxu0 0.0
    %552 = vmatpush1.msra.mxu0 %v534
    %553 = vmatprep.subr.mxu0 0.0
    %554 = vmatpush1.msra.mxu0 0.0
    %555 = vmatprep.subr.mxu0 0.0
    %556 = vmatpush1.msra.mxu0 0.0
    %557 = vmatprep.subr.mxu0 0.0
    %558 = vmatpush1.msra.mxu0 0.0
    %559 = vmatprep.subr.mxu0 0.0
    %560 = vmatpush1.msra.mxu0 0.0
    %561 = vmatprep.subr.mxu0 0.0
    %562 = vmatpush1.msra.mxu0 0.0
    %563 = vmatprep.subr.mxu0 0.0
    %564 = vmatpush1.msra.mxu0 0.0
    %565 = vmatprep.subr.mxu0 0.0
    %566 = vmatpush1.msra.mxu0 0.0
    %567 = vmatprep.subr.mxu0 0.0
    %568 = vmatpush1.msra.mxu0 0.0
    %569 = vmatprep.subr.mxu0 0.0
    %570 = vmatpush1.msra.mxu0 0.0
    %571 = vmatprep.subr.mxu0 0.0
    %572 = vmatpush1.msra.mxu0 0.0
    %573 = vmatprep.subr.mxu0 0.0
    %574 = vmatpush1.msra.mxu0 0.0
    %575 = vmatprep.subr.mxu0 0.0
    %576 = vmatpush1.msra.mxu0 0.0
    %577 = vmatprep.subr.mxu0 0.0
    %578 = vmatpush1.msra.mxu0 0.0
    %579 = vmatprep.subr.mxu0 0.0
    %580 = vmatpush1.msra.mxu0 0.0
    %581 = vmatprep.subr.mxu0 0.0
    %582 = vmatpush1.msra.mxu0 0.0
    %583 = vmatprep.subr.mxu0 0.0
    %584 = vmatpush1.msra.mxu0 0.0
    %585 = vmatprep.subr.mxu0 0.0
    %586 = vmatpush1.msra.mxu0 0.0
    %587 = vmatprep.subr.mxu0 0.0
    %588 = vmatpush1.msra.mxu0 0.0
    %589 = vmatprep.subr.mxu0 0.0
    %590 = vmatpush1.msra.mxu0 0.0
    %591 = vmatprep.subr.mxu0 0.0
    %592 = vmatpush1.msra.mxu0 0.0
    %593 = vmatprep.subr.mxu0 0.0
    %594 = vmatpush1.msra.mxu0 0.0
    %595 = vmatprep.subr.mxu0 0.0
    %596 = vmatpush1.msra.mxu0 0.0
    %597 = vmatprep.subr.mxu0 0.0
    %598 = vmatpush1.msra.mxu0 0.0
    %599 = vmatprep.subr.mxu0 0.0
    %600 = vmatpush1.msra.mxu0 0.0
    %601 = vmatprep.subr.mxu0 0.0
    %602 = vmatpush1.msra.mxu0 0.0
    %603 = vmatprep.subr.mxu0 0.0
    %604 = vmatpush1.msra.mxu0 0.0
    %605 = vmatprep.subr.mxu0 0.0
    %606 = vmatpush1.msra.mxu0 0.0
    %607 = vmatprep.subr.mxu0 0.0
    %608 = vmatpush1.msra.mxu0 0.0
    %609 = vmatprep.mubr.f32.mxu0 0.0
    %610 = vmatmul.mubr.f32.gmra.mrb[0].mxu0 %v540
    %v611 = vpop.f32.mrb[0].mxu0
    %v612 = vadd.f32 %v538, %v611
    %v613 = vpop.f32.mrb[0].mxu0
    %614 = vmatprep.mubr.f32.mxu0 0.0
    %615 = vmatmul.mubr.f32.gmra.mrb[0].mxu0 %v543
    %v616 = vpop.f32.mrb[0].mxu0
    %v617 = vadd.f32 %v538, %v616
    %v618 = vpop.f32.mrb[0].mxu0
    %619 = vdwg.mxu0
    %v620 = vtanh.pop %v612
    %v621 = vtanh.pop %v617
    %v622 = vmul.f32 %v620, %v36
    %v623 = vmul.f32 %v621, %v41
    %v624 = vadd.f32 %v529, %v622
    %v625 = vadd.f32 %v530, %v623
    %v626 = vld [vmem:[#allocation2 + $0x120] sm:$0xff]
    %v627 = vld [vmem:[#allocation2 + $0x128] sm:$0xff]
    %v628 = vld [vmem:[#allocation2 + $0x130] sm:$0xff]
    %v629 = vld [vmem:[#allocation2 + $0x138] sm:$0xff]
    %v630 = vlaneseq
    %v631 = vshrl.u32 %v630, 7
    %v632 = vsub.s32 5, %v631
    %v633 = vrot.slane %v150, %v632
    %v635 = vsel %vm160, %v622, 0
    %v638 = vsel %vm160, %v623, 0
    %640 = vmatprep.subr.mxu0 0.0
    %641 = vmatpush1.msra.mxu0 %v626
    %642 = vmatprep.subr.mxu0 0.0
    %643 = vmatpush1.msra.mxu0 %v627
    %644 = vmatprep.subr.mxu0 0.0
    %645 = vmatpush1.msra.mxu0 %v628
    %646 = vmatprep.subr.mxu0 0.0
    %647 = vmatpush1.msra.mxu0 %v629
    %648 = vmatprep.subr.mxu0 0.0
    %649 = vmatpush1.msra.mxu0 0.0
    %650 = vmatprep.subr.mxu0 0.0
    %651 = vmatpush1.msra.mxu0 0.0
    %652 = vmatprep.subr.mxu0 0.0
    %653 = vmatpush1.msra.mxu0 0.0
    %654 = vmatprep.subr.mxu0 0.0
    %655 = vmatpush1.msra.mxu0 0.0
    %656 = vmatprep.subr.mxu0 0.0
    %657 = vmatpush1.msra.mxu0 0.0
    %658 = vmatprep.subr.mxu0 0.0
    %659 = vmatpush1.msra.mxu0 0.0
    %660 = vmatprep.subr.mxu0 0.0
    %661 = vmatpush1.msra.mxu0 0.0
    %662 = vmatprep.subr.mxu0 0.0
    %663 = vmatpush1.msra.mxu0 0.0
    %664 = vmatprep.subr.mxu0 0.0
    %665 = vmatpush1.msra.mxu0 0.0
    %666 = vmatprep.subr.mxu0 0.0
    %667 = vmatpush1.msra.mxu0 0.0
    %668 = vmatprep.subr.mxu0 0.0
    %669 = vmatpush1.msra.mxu0 0.0
    %670 = vmatprep.subr.mxu0 0.0
    %671 = vmatpush1.msra.mxu0 0.0
    %672 = vmatprep.subr.mxu0 0.0
    %673 = vmatpush1.msra.mxu0 0.0
    %674 = vmatprep.subr.mxu0 0.0
    %675 = vmatpush1.msra.mxu0 0.0
    %676 = vmatprep.subr.mxu0 0.0
    %677 = vmatpush1.msra.mxu0 0.0
    %678 = vmatprep.subr.mxu0 0.0
    %679 = vmatpush1.msra.mxu0 0.0
    %680 = vmatprep.subr.mxu0 0.0
    %681 = vmatpush1.msra.mxu0 0.0
    %682 = vmatprep.subr.mxu0 0.0
    %683 = vmatpush1.msra.mxu0 0.0
    %684 = vmatprep.subr.mxu0 0.0
    %685 = vmatpush1.msra.mxu0 0.0
    %686 = vmatprep.subr.mxu0 0.0
    %687 = vmatpush1.msra.mxu0 0.0
    %688 = vmatprep.subr.mxu0 0.0
    %689 = vmatpush1.msra.mxu0 0.0
    %690 = vmatprep.subr.mxu0 0.0
    %691 = vmatpush1.msra.mxu0 0.0
    %692 = vmatprep.subr.mxu0 0.0
    %693 = vmatpush1.msra.mxu0 0.0
    %694 = vmatprep.subr.mxu0 0.0
    %695 = vmatpush1.msra.mxu0 0.0
    %696 = vmatprep.subr.mxu0 0.0
    %697 = vmatpush1.msra.mxu0 0.0
    %698 = vmatprep.subr.mxu0 0.0
    %699 = vmatpush1.msra.mxu0 0.0
    %700 = vmatprep.subr.mxu0 0.0
    %701 = vmatpush1.msra.mxu0 0.0
    %702 = vmatprep.subr.mxu0 0.0
    %703 = vmatpush1.msra.mxu0 0.0
    %704 = vmatprep.mubr.f32.mxu0 0.0
    %705 = vmatmul.mubr.f32.gmra.mrb[0].mxu0 %v635
    %v706 = vpop.f32.mrb[0].mxu0
    %v707 = vadd.f32 %v633, %v706
    %v708 = vpop.f32.mrb[0].mxu0
    %709 = vmatprep.mubr.f32.mxu0 0.0
    %710 = vmatmul.mubr.f32.gmra.mrb[0].mxu0 %v638
    %v711 = vpop.f32.mrb[0].mxu0
    %v712 = vadd.f32 %v633, %v711
    %v713 = vpop.f32.mrb[0].mxu0
    %714 = vdwg.mxu0
    %v715 = vtanh.pop %v707
    %v716 = vtanh.pop %v712
    %v717 = vmul.f32 %v715, %v36
    %v718 = vmul.f32 %v716, %v41
    %v719 = vadd.f32 %v624, %v717
    %v720 = vadd.f32 %v625, %v718
    %v721 = vld [vmem:[#allocation2 + $0x140] sm:$0xff]
    %v722 = vld [vmem:[#allocation2 + $0x148] sm:$0xff]
    %v723 = vld [vmem:[#allocation2 + $0x150] sm:$0xff]
    %v724 = vld [vmem:[#allocation2 + $0x158] sm:$0xff]
    %v725 = vlaneseq
    %v726 = vshrl.u32 %v725, 7
    %v727 = vsub.s32 6, %v726
    %v728 = vrot.slane %v150, %v727
    %v730 = vsel %vm160, %v717, 0
    %v733 = vsel %vm160, %v718, 0
    %735 = vmatprep.subr.mxu0 0.0
    %736 = vmatpush1.msra.mxu0 %v721
    %737 = vmatprep.subr.mxu0 0.0
    %738 = vmatpush1.msra.mxu0 %v722
    %739 = vmatprep.subr.mxu0 0.0
    %740 = vmatpush1.msra.mxu0 %v723
    %741 = vmatprep.subr.mxu0 0.0
    %742 = vmatpush1.msra.mxu0 %v724
    %743 = vmatprep.subr.mxu0 0.0
    %744 = vmatpush1.msra.mxu0 0.0
    %745 = vmatprep.subr.mxu0 0.0
    %746 = vmatpush1.msra.mxu0 0.0
    %747 = vmatprep.subr.mxu0 0.0
    %748 = vmatpush1.msra.mxu0 0.0
    %749 = vmatprep.subr.mxu0 0.0
    %750 = vmatpush1.msra.mxu0 0.0
    %751 = vmatprep.subr.mxu0 0.0
    %752 = vmatpush1.msra.mxu0 0.0
    %753 = vmatprep.subr.mxu0 0.0
    %754 = vmatpush1.msra.mxu0 0.0
    %755 = vmatprep.subr.mxu0 0.0
    %756 = vmatpush1.msra.mxu0 0.0
    %757 = vmatprep.subr.mxu0 0.0
    %758 = vmatpush1.msra.mxu0 0.0
    %759 = vmatprep.subr.mxu0 0.0
    %760 = vmatpush1.msra.mxu0 0.0
    %761 = vmatprep.subr.mxu0 0.0
    %762 = vmatpush1.msra.mxu0 0.0
    %763 = vmatprep.subr.mxu0 0.0
    %764 = vmatpush1.msra.mxu0 0.0
    %765 = vmatprep.subr.mxu0 0.0
    %766 = vmatpush1.msra.mxu0 0.0
    %767 = vmatprep.subr.mxu0 0.0
    %768 = vmatpush1.msra.mxu0 0.0
    %769 = vmatprep.subr.mxu0 0.0
    %770 = vmatpush1.msra.mxu0 0.0
    %771 = vmatprep.subr.mxu0 0.0
    %772 = vmatpush1.msra.mxu0 0.0
    %773 = vmatprep.subr.mxu0 0.0
    %774 = vmatpush1.msra.mxu0 0.0
    %775 = vmatprep.subr.mxu0 0.0
    %776 = vmatpush1.msra.mxu0 0.0
    %777 = vmatprep.subr.mxu0 0.0
    %778 = vmatpush1.msra.mxu0 0.0
    %779 = vmatprep.subr.mxu0 0.0
    %780 = vmatpush1.msra.mxu0 0.0
    %781 = vmatprep.subr.mxu0 0.0
    %782 = vmatpush1.msra.mxu0 0.0
    %783 = vmatprep.subr.mxu0 0.0
    %784 = vmatpush1.msra.mxu0 0.0
    %785 = vmatprep.subr.mxu0 0.0
    %786 = vmatpush1.msra.mxu0 0.0
    %787 = vmatprep.subr.mxu0 0.0
    %788 = vmatpush1.msra.mxu0 0.0
    %789 = vmatprep.subr.mxu0 0.0
    %790 = vmatpush1.msra.mxu0 0.0
    %791 = vmatprep.subr.mxu0 0.0
    %792 = vmatpush1.msra.mxu0 0.0
    %793 = vmatprep.subr.mxu0 0.0
    %794 = vmatpush1.msra.mxu0 0.0
    %795 = vmatprep.subr.mxu0 0.0
    %796 = vmatpush1.msra.mxu0 0.0
    %797 = vmatprep.subr.mxu0 0.0
    %798 = vmatpush1.msra.mxu0 0.0
    %799 = vmatprep.mubr.f32.mxu0 0.0
    %800 = vmatmul.mubr.f32.gmra.mrb[0].mxu0 %v730
    %v801 = vpop.f32.mrb[0].mxu0
    %v802 = vadd.f32 %v728, %v801
    %v803 = vpop.f32.mrb[0].mxu0
    %804 = vmatprep.mubr.f32.mxu0 0.0
    %805 = vmatmul.mubr.f32.gmra.mrb[0].mxu0 %v733
    %v806 = vpop.f32.mrb[0].mxu0
    %v807 = vadd.f32 %v728, %v806
    %v808 = vpop.f32.mrb[0].mxu0
    %809 = vdwg.mxu0
    %v810 = vtanh.pop %v802
    %v811 = vtanh.pop %v807
    %v812 = vmul.f32 %v810, %v36
    %v813 = vmul.f32 %v811, %v41
    %v814 = vadd.f32 %v719, %v812
    %v815 = vadd.f32 %v720, %v813
    %v816 = vld [vmem:[#allocation2 + $0x160] sm:$0xff]
    %v817 = vld [vmem:[#allocation2 + $0x168] sm:$0xff]
    %v818 = vld [vmem:[#allocation2 + $0x170] sm:$0xff]
    %v819 = vld [vmem:[#allocation2 + $0x178] sm:$0xff]
    %v820 = vlaneseq
    %v821 = vshrl.u32 %v820, 7
    %v822 = vsub.s32 7, %v821
    %v823 = vrot.slane %v150, %v822
    %v825 = vsel %vm160, %v812, 0
    %v828 = vsel %vm160, %v813, 0
    %830 = vmatprep.subr.mxu0 0.0
    %831 = vmatpush1.msra.mxu0 %v816
    %832 = vmatprep.subr.mxu0 0.0
    %833 = vmatpush1.msra.mxu0 %v817
    %834 = vmatprep.subr.mxu0 0.0
    %835 = vmatpush1.msra.mxu0 %v818
    %836 = vmatprep.subr.mxu0 0.0
    %837 = vmatpush1.msra.mxu0 %v819
    %838 = vmatprep.subr.mxu0 0.0
    %839 = vmatpush1.msra.mxu0 0.0
    %840 = vmatprep.subr.mxu0 0.0
    %841 = vmatpush1.msra.mxu0 0.0
    %842 = vmatprep.subr.mxu0 0.0
    %843 = vmatpush1.msra.mxu0 0.0
    %844 = vmatprep.subr.mxu0 0.0
    %845 = vmatpush1.msra.mxu0 0.0
    %846 = vmatprep.subr.mxu0 0.0
    %847 = vmatpush1.msra.mxu0 0.0
    %848 = vmatprep.subr.mxu0 0.0
    %849 = vmatpush1.msra.mxu0 0.0
    %850 = vmatprep.subr.mxu0 0.0
    %851 = vmatpush1.msra.mxu0 0.0
    %852 = vmatprep.subr.mxu0 0.0
    %853 = vmatpush1.msra.mxu0 0.0
    %854 = vmatprep.subr.mxu0 0.0
    %855 = vmatpush1.msra.mxu0 0.0
    %856 = vmatprep.subr.mxu0 0.0
    %857 = vmatpush1.msra.mxu0 0.0
    %858 = vmatprep.subr.mxu0 0.0
    %859 = vmatpush1.msra.mxu0 0.0
    %860 = vmatprep.subr.mxu0 0.0
    %861 = vmatpush1.msra.mxu0 0.0
    %862 = vmatprep.subr.mxu0 0.0
    %863 = vmatpush1.msra.mxu0 0.0
    %864 = vmatprep.subr.mxu0 0.0
    %865 = vmatpush1.msra.mxu0 0.0
    %866 = vmatprep.subr.mxu0 0.0
    %867 = vmatpush1.msra.mxu0 0.0
    %868 = vmatprep.subr.mxu0 0.0
    %869 = vmatpush1.msra.mxu0 0.0
    %870 = vmatprep.subr.mxu0 0.0
    %871 = vmatpush1.msra.mxu0 0.0
    %872 = vmatprep.subr.mxu0 0.0
    %873 = vmatpush1.msra.mxu0 0.0
    %874 = vmatprep.subr.mxu0 0.0
    %875 = vmatpush1.msra.mxu0 0.0
    %876 = vmatprep.subr.mxu0 0.0
    %877 = vmatpush1.msra.mxu0 0.0
    %878 = vmatprep.subr.mxu0 0.0
    %879 = vmatpush1.msra.mxu0 0.0
    %880 = vmatprep.subr.mxu0 0.0
    %881 = vmatpush1.msra.mxu0 0.0
    %882 = vmatprep.subr.mxu0 0.0
    %883 = vmatpush1.msra.mxu0 0.0
    %884 = vmatprep.subr.mxu0 0.0
    %885 = vmatpush1.msra.mxu0 0.0
    %886 = vmatprep.subr.mxu0 0.0
    %887 = vmatpush1.msra.mxu0 0.0
    %888 = vmatprep.subr.mxu0 0.0
    %889 = vmatpush1.msra.mxu0 0.0
    %890 = vmatprep.subr.mxu0 0.0
    %891 = vmatpush1.msra.mxu0 0.0
    %892 = vmatprep.subr.mxu0 0.0
    %893 = vmatpush1.msra.mxu0 0.0
    %894 = vmatprep.mubr.f32.mxu0 0.0
    %895 = vmatmul.mubr.f32.gmra.mrb[0].mxu0 %v825
    %v896 = vpop.f32.mrb[0].mxu0
    %v897 = vadd.f32 %v823, %v896
    %v898 = vpop.f32.mrb[0].mxu0
    %899 = vmatprep.mubr.f32.mxu0 0.0
    %900 = vmatmul.mubr.f32.gmra.mrb[0].mxu0 %v828
    %v901 = vpop.f32.mrb[0].mxu0
    %v902 = vadd.f32 %v823, %v901
    %v903 = vpop.f32.mrb[0].mxu0
    %904 = vdwg.mxu0
    %v905 = vtanh.pop %v897
    %v906 = vtanh.pop %v902
    %v907 = vmul.f32 %v905, %v36
    %v908 = vmul.f32 %v906, %v41
    %v909 = vld [vmem:[#allocation2 + $0x180] sm:$0xff]
    %v910 = vld [vmem:[#allocation2 + $0x188] sm:$0xff]
    %v911 = vld [vmem:[#allocation2 + $0x190] sm:$0xff]
    %v912 = vld [vmem:[#allocation2 + $0x198] sm:$0xff]
    %v913 = vlaneseq
    %v914 = vshrl.u32 %v913, 7
    %v915 = vsub.s32 0, %v914
    %v916 = vrot.slane %v151, %v915
    %v918 = vsel %vm160, %v907, 0
    %v921 = vsel %vm160, %v908, 0
    %923 = vmatprep.subr.mxu0 0.0
    %924 = vmatpush1.msra.mxu0 %v909
    %925 = vmatprep.subr.mxu0 0.0
    %926 = vmatpush1.msra.mxu0 %v910
    %927 = vmatprep.subr.mxu0 0.0
    %928 = vmatpush1.msra.mxu0 %v911
    %929 = vmatprep.subr.mxu0 0.0
    %930 = vmatpush1.msra.mxu0 %v912
    %931 = vmatprep.subr.mxu0 0.0
    %932 = vmatpush1.msra.mxu0 0.0
    %933 = vmatprep.subr.mxu0 0.0
    %934 = vmatpush1.msra.mxu0 0.0
    %935 = vmatprep.subr.mxu0 0.0
    %936 = vmatpush1.msra.mxu0 0.0
    %937 = vmatprep.subr.mxu0 0.0
    %938 = vmatpush1.msra.mxu0 0.0
    %939 = vmatprep.subr.mxu0 0.0
    %940 = vmatpush1.msra.mxu0 0.0
    %941 = vmatprep.subr.mxu0 0.0
    %942 = vmatpush1.msra.mxu0 0.0
    %943 = vmatprep.subr.mxu0 0.0
    %944 = vmatpush1.msra.mxu0 0.0
    %945 = vmatprep.subr.mxu0 0.0
    %946 = vmatpush1.msra.mxu0 0.0
    %947 = vmatprep.subr.mxu0 0.0
    %948 = vmatpush1.msra.mxu0 0.0
    %949 = vmatprep.subr.mxu0 0.0
    %950 = vmatpush1.msra.mxu0 0.0
    %951 = vmatprep.subr.mxu0 0.0
    %952 = vmatpush1.msra.mxu0 0.0
    %953 = vmatprep.subr.mxu0 0.0
    %954 = vmatpush1.msra.mxu0 0.0
    %955 = vmatprep.subr.mxu0 0.0
    %956 = vmatpush1.msra.mxu0 0.0
    %957 = vmatprep.subr.mxu0 0.0
    %958 = vmatpush1.msra.mxu0 0.0
    %959 = vmatprep.subr.mxu0 0.0
    %960 = vmatpush1.msra.mxu0 0.0
    %961 = vmatprep.subr.mxu0 0.0
    %962 = vmatpush1.msra.mxu0 0.0
    %963 = vmatprep.subr.mxu0 0.0
    %964 = vmatpush1.msra.mxu0 0.0
    %965 = vmatprep.subr.mxu0 0.0
    %966 = vmatpush1.msra.mxu0 0.0
    %967 = vmatprep.subr.mxu0 0.0
    %968 = vmatpush1.msra.mxu0 0.0
    %969 = vmatprep.subr.mxu0 0.0
    %970 = vmatpush1.msra.mxu0 0.0
    %971 = vmatprep.subr.mxu0 0.0
    %972 = vmatpush1.msra.mxu0 0.0
    %973 = vmatprep.subr.mxu0 0.0
    %974 = vmatpush1.msra.mxu0 0.0
    %975 = vmatprep.subr.mxu0 0.0
    %976 = vmatpush1.msra.mxu0 0.0
    %977 = vmatprep.subr.mxu0 0.0
    %978 = vmatpush1.msra.mxu0 0.0
    %979 = vmatprep.subr.mxu0 0.0
    %980 = vmatpush1.msra.mxu0 0.0
    %981 = vmatprep.subr.mxu0 0.0
    %982 = vmatpush1.msra.mxu0 0.0
    %983 = vmatprep.subr.mxu0 0.0
    %984 = vmatpush1.msra.mxu0 0.0
    %985 = vmatprep.subr.mxu0 0.0
    %986 = vmatpush1.msra.mxu0 0.0
    %987 = vmatprep.mubr.f32.mxu0 0.0
    %988 = vmatmul.mubr.f32.gmra.mrb[0].mxu0 %v918
    %v989 = vpop.f32.mrb[0].mxu0
    %v990 = vadd.f32 %v916, %v989
    %v991 = vpop.f32.mrb[0].mxu0
    %992 = vmatprep.mubr.f32.mxu0 0.0
    %993 = vmatmul.mubr.f32.gmra.mrb[0].mxu0 %v921
    %v994 = vpop.f32.mrb[0].mxu0
    %v995 = vadd.f32 %v916, %v994
    %v996 = vpop.f32.mrb[0].mxu0
    %997 = vdwg.mxu0
    %v998 = vtanh.pop %v990
    %v999 = vtanh.pop %v995
    %v1000 = vmul.f32 %v998, %v36
    %v1001 = vmul.f32 %v999, %v41
    %v1002 = vadd.f32 %v907, %v1000
    %v1003 = vadd.f32 %v908, %v1001
    %v1004 = vld [vmem:[#allocation2 + $0x1a0] sm:$0xff]
    %v1005 = vld [vmem:[#allocation2 + $0x1a8] sm:$0xff]
    %v1006 = vld [vmem:[#allocation2 + $0x1b0] sm:$0xff]
    %v1007 = vld [vmem:[#allocation2 + $0x1b8] sm:$0xff]
    %v1008 = vlaneseq
    %v1009 = vshrl.u32 %v1008, 7
    %v1010 = vsub.s32 1, %v1009
    %v1011 = vrot.slane %v151, %v1010
    %v1013 = vsel %vm160, %v1000, 0
    %v1016 = vsel %vm160, %v1001, 0
    %1018 = vmatprep.subr.mxu0 0.0
    %1019 = vmatpush1.msra.mxu0 %v1004
    %1020 = vmatprep.subr.mxu0 0.0
    %1021 = vmatpush1.msra.mxu0 %v1005
    %1022 = vmatprep.subr.mxu0 0.0
    %1023 = vmatpush1.msra.mxu0 %v1006
    %1024 = vmatprep.subr.mxu0 0.0
    %1025 = vmatpush1.msra.mxu0 %v1007
    %1026 = vmatprep.subr.mxu0 0.0
    %1027 = vmatpush1.msra.mxu0 0.0
    %1028 = vmatprep.subr.mxu0 0.0
    %1029 = vmatpush1.msra.mxu0 0.0
    %1030 = vmatprep.subr.mxu0 0.0
    %1031 = vmatpush1.msra.mxu0 0.0
    %1032 = vmatprep.subr.mxu0 0.0
    %1033 = vmatpush1.msra.mxu0 0.0
    %1034 = vmatprep.subr.mxu0 0.0
    %1035 = vmatpush1.msra.mxu0 0.0
    %1036 = vmatprep.subr.mxu0 0.0
    %1037 = vmatpush1.msra.mxu0 0.0
    %1038 = vmatprep.subr.mxu0 0.0
    %1039 = vmatpush1.msra.mxu0 0.0
    %1040 = vmatprep.subr.mxu0 0.0
    %1041 = vmatpush1.msra.mxu0 0.0
    %1042 = vmatprep.subr.mxu0 0.0
    %1043 = vmatpush1.msra.mxu0 0.0
    %1044 = vmatprep.subr.mxu0 0.0
    %1045 = vmatpush1.msra.mxu0 0.0
    %1046 = vmatprep.subr.mxu0 0.0
    %1047 = vmatpush1.msra.mxu0 0.0
    %1048 = vmatprep.subr.mxu0 0.0
    %1049 = vmatpush1.msra.mxu0 0.0
    %1050 = vmatprep.subr.mxu0 0.0
    %1051 = vmatpush1.msra.mxu0 0.0
    %1052 = vmatprep.subr.mxu0 0.0
    %1053 = vmatpush1.msra.mxu0 0.0
    %1054 = vmatprep.subr.mxu0 0.0
    %1055 = vmatpush1.msra.mxu0 0.0
    %1056 = vmatprep.subr.mxu0 0.0
    %1057 = vmatpush1.msra.mxu0 0.0
    %1058 = vmatprep.subr.mxu0 0.0
    %1059 = vmatpush1.msra.mxu0 0.0
    %1060 = vmatprep.subr.mxu0 0.0
    %1061 = vmatpush1.msra.mxu0 0.0
    %1062 = vmatprep.subr.mxu0 0.0
    %1063 = vmatpush1.msra.mxu0 0.0
    %1064 = vmatprep.subr.mxu0 0.0
    %1065 = vmatpush1.msra.mxu0 0.0
    %1066 = vmatprep.subr.mxu0 0.0
    %1067 = vmatpush1.msra.mxu0 0.0
    %1068 = vmatprep.subr.mxu0 0.0
    %1069 = vmatpush1.msra.mxu0 0.0
    %1070 = vmatprep.subr.mxu0 0.0
    %1071 = vmatpush1.msra.mxu0 0.0
    %1072 = vmatprep.subr.mxu0 0.0
    %1073 = vmatpush1.msra.mxu0 0.0
    %1074 = vmatprep.subr.mxu0 0.0
    %1075 = vmatpush1.msra.mxu0 0.0
    %1076 = vmatprep.subr.mxu0 0.0
    %1077 = vmatpush1.msra.mxu0 0.0
    %1078 = vmatprep.subr.mxu0 0.0
    %1079 = vmatpush1.msra.mxu0 0.0
    %1080 = vmatprep.subr.mxu0 0.0
    %1081 = vmatpush1.msra.mxu0 0.0
    %1082 = vmatprep.mubr.f32.mxu0 0.0
    %1083 = vmatmul.mubr.f32.gmra.mrb[0].mxu0 %v1013
    %v1084 = vpop.f32.mrb[0].mxu0
    %v1085 = vadd.f32 %v1011, %v1084
    %v1086 = vpop.f32.mrb[0].mxu0
    %1087 = vmatprep.mubr.f32.mxu0 0.0
    %1088 = vmatmul.mubr.f32.gmra.mrb[0].mxu0 %v1016
    %v1089 = vpop.f32.mrb[0].mxu0
    %v1090 = vadd.f32 %v1011, %v1089
    %v1091 = vpop.f32.mrb[0].mxu0
    %1092 = vdwg.mxu0
    %v1093 = vtanh.pop %v1085
    %v1094 = vtanh.pop %v1090
    %v1095 = vmul.f32 %v1093, %v36
    %v1096 = vmul.f32 %v1094, %v41
    %v1097 = vadd.f32 %v1002, %v1095
    %v1098 = vadd.f32 %v1003, %v1096
    %v1099 = vld [vmem:[#allocation2 + $0x1c0] sm:$0xff]
    %v1100 = vld [vmem:[#allocation2 + $0x1c8] sm:$0xff]
    %v1101 = vld [vmem:[#allocation2 + $0x1d0] sm:$0xff]
    %v1102 = vld [vmem:[#allocation2 + $0x1d8] sm:$0xff]
    %v1103 = vlaneseq
    %v1104 = vshrl.u32 %v1103, 7
    %v1105 = vsub.s32 2, %v1104
    %v1106 = vrot.slane %v151, %v1105
    %v1108 = vsel %vm160, %v1095, 0
    %v1111 = vsel %vm160, %v1096, 0
    %1113 = vmatprep.subr.mxu0 0.0
    %1114 = vmatpush1.msra.mxu0 %v1099
    %1115 = vmatprep.subr.mxu0 0.0
    %1116 = vmatpush1.msra.mxu0 %v1100
    %1117 = vmatprep.subr.mxu0 0.0
    %1118 = vmatpush1.msra.mxu0 %v1101
    %1119 = vmatprep.subr.mxu0 0.0
    %1120 = vmatpush1.msra.mxu0 %v1102
    %1121 = vmatprep.subr.mxu0 0.0
    %1122 = vmatpush1.msra.mxu0 0.0
    %1123 = vmatprep.subr.mxu0 0.0
    %1124 = vmatpush1.msra.mxu0 0.0
    %1125 = vmatprep.subr.mxu0 0.0
    %1126 = vmatpush1.msra.mxu0 0.0
    %1127 = vmatprep.subr.mxu0 0.0
    %1128 = vmatpush1.msra.mxu0 0.0
    %1129 = vmatprep.subr.mxu0 0.0
    %1130 = vmatpush1.msra.mxu0 0.0
    %1131 = vmatprep.subr.mxu0 0.0
    %1132 = vmatpush1.msra.mxu0 0.0
    %1133 = vmatprep.subr.mxu0 0.0
    %1134 = vmatpush1.msra.mxu0 0.0
    %1135 = vmatprep.subr.mxu0 0.0
    %1136 = vmatpush1.msra.mxu0 0.0
    %1137 = vmatprep.subr.mxu0 0.0
    %1138 = vmatpush1.msra.mxu0 0.0
    %1139 = vmatprep.subr.mxu0 0.0
    %1140 = vmatpush1.msra.mxu0 0.0
    %1141 = vmatprep.subr.mxu0 0.0
    %1142 = vmatpush1.msra.mxu0 0.0
    %1143 = vmatprep.subr.mxu0 0.0
    %1144 = vmatpush1.msra.mxu0 0.0
    %1145 = vmatprep.subr.mxu0 0.0
    %1146 = vmatpush1.msra.mxu0 0.0
    %1147 = vmatprep.subr.mxu0 0.0
    %1148 = vmatpush1.msra.mxu0 0.0
    %1149 = vmatprep.subr.mxu0 0.0
    %1150 = vmatpush1.msra.mxu0 0.0
    %1151 = vmatprep.subr.mxu0 0.0
    %1152 = vmatpush1.msra.mxu0 0.0
    %1153 = vmatprep.subr.mxu0 0.0
    %1154 = vmatpush1.msra.mxu0 0.0
    %1155 = vmatprep.subr.mxu0 0.0
    %1156 = vmatpush1.msra.mxu0 0.0
    %1157 = vmatprep.subr.mxu0 0.0
    %1158 = vmatpush1.msra.mxu0 0.0
    %1159 = vmatprep.subr.mxu0 0.0
    %1160 = vmatpush1.msra.mxu0 0.0
    %1161 = vmatprep.subr.mxu0 0.0
    %1162 = vmatpush1.msra.mxu0 0.0
    %1163 = vmatprep.subr.mxu0 0.0
    %1164 = vmatpush1.msra.mxu0 0.0
    %1165 = vmatprep.subr.mxu0 0.0
    %1166 = vmatpush1.msra.mxu0 0.0
    %1167 = vmatprep.subr.mxu0 0.0
    %1168 = vmatpush1.msra.mxu0 0.0
    %1169 = vmatprep.subr.mxu0 0.0
    %1170 = vmatpush1.msra.mxu0 0.0
    %1171 = vmatprep.subr.mxu0 0.0
    %1172 = vmatpush1.msra.mxu0 0.0
    %1173 = vmatprep.subr.mxu0 0.0
    %1174 = vmatpush1.msra.mxu0 0.0
    %1175 = vmatprep.subr.mxu0 0.0
    %1176 = vmatpush1.msra.mxu0 0.0
    %1177 = vmatprep.mubr.f32.mxu0 0.0
    %1178 = vmatmul.mubr.f32.gmra.mrb[0].mxu0 %v1108
    %v1179 = vpop.f32.mrb[0].mxu0
    %v1180 = vadd.f32 %v1106, %v1179
    %v1181 = vpop.f32.mrb[0].mxu0
    %1182 = vmatprep.mubr.f32.mxu0 0.0
    %1183 = vmatmul.mubr.f32.gmra.mrb[0].mxu0 %v1111
    %v1184 = vpop.f32.mrb[0].mxu0
    %v1185 = vadd.f32 %v1106, %v1184
    %v1186 = vpop.f32.mrb[0].mxu0
    %1187 = vdwg.mxu0
    %v1188 = vtanh.pop %v1180
    %v1189 = vtanh.pop %v1185
    %v1190 = vmul.f32 %v1188, %v36
    %v1191 = vmul.f32 %v1189, %v41
    %v1192 = vadd.f32 %v1097, %v1190
    %v1193 = vadd.f32 %v1098, %v1191
    %v1194 = vmul.f32 %v436, 0.25
    %v1195 = vmul.f32 %v437, 0.25
    %v1196 = vmul.f32 %v814, 0.25
    %v1197 = vmul.f32 %v815, 0.25
    %v1198 = vmul.f32 %v1192, 0.25
    %v1199 = vmul.f32 %v1193, 0.25
    %1202 = vrot.lane.b32.xlu0 %v1196, 32
    %v1203 = vpop.permute.xlu0 %1202
    %1204 = vrot.lane.b32.xlu0 %v1197, 32
    %v1205 = vpop.permute.xlu0 %1204
    %1210 = vrot.lane.b32.xlu0 %v1198, 64
    %v1211 = vpop.permute.xlu0 %1210
    %1212 = vrot.lane.b32.xlu0 %v1199, 64
    %v1213 = vpop.permute.xlu0 %1212
    %v1216 = vsel %vm160, %v1194, %v1203
    %v1217 = vsel %vm160, %v1195, %v1205
    %vm1218 = vcmask 523264
    %v1219 = vsel %vm1218, %v1216, %v1211
    %v1220 = vsel %vm1218, %v1217, %v1213
    %v1221 = vld [vmem:[%s1] sm:$0xff]
    %v1222 = vld [vmem:[%s1 + $0x8] sm:$0xff]
    %v1223 = vadd.f32 %v1221, %v1222
    %1224 = vadd.xlane.f32.xlu0 %v1223
    %v1225 = vpop.xlane.xlu0 %1224
    %v1226 = vrcp.pop 256.0
    %v1227 = vmul.f32 %v1225, %v1226
    %v1228 = vld [vmem:[#allocation2 + $0x210] sm:$0xff]
    %v1229 = vld [vmem:[#allocation2 + $0x218] sm:$0x1]
    %v1230 = vld [vmem:[#allocation2 + $0x220] sm:$0x3]
    %v1231 = vmul.f32 %v1227, %v1228
    %v1232 = vlaneseq
    %v1233 = vshrl.u32 %v1232, 7
    %v1234 = vsub.s32 0, %v1233
    %v1235 = vrot.slane %v1229, %v1234
    %vm1236 = vcmask 64512
    %v1238 = vsel %vm1236, %v1230, 0
    %1240 = vmatprep.subr.mxu0 0.0
    %1241 = vmatpush1.msra.mxu0 %v1231
    %1242 = vmatprep.subr.mxu0 0.0
    %1243 = vmatpush1.msra.mxu0 0.0
    %1244 = vmatprep.subr.mxu0 0.0
    %1245 = vmatpush1.msra.mxu0 0.0
    %1246 = vmatprep.subr.mxu0 0.0
    %1247 = vmatpush1.msra.mxu0 0.0
    %1248 = vmatprep.subr.mxu0 0.0
    %1249 = vmatpush1.msra.mxu0 0.0
    %1250 = vmatprep.subr.mxu0 0.0
    %1251 = vmatpush1.msra.mxu0 0.0
    %1252 = vmatprep.subr.mxu0 0.0
    %1253 = vmatpush1.msra.mxu0 0.0
    %1254 = vmatprep.subr.mxu0 0.0
    %1255 = vmatpush1.msra.mxu0 0.0
    %1256 = vmatprep.subr.mxu0 0.0
    %1257 = vmatpush1.msra.mxu0 0.0
    %1258 = vmatprep.subr.mxu0 0.0
    %1259 = vmatpush1.msra.mxu0 0.0
    %1260 = vmatprep.subr.mxu0 0.0
    %1261 = vmatpush1.msra.mxu0 0.0
    %1262 = vmatprep.subr.mxu0 0.0
    %1263 = vmatpush1.msra.mxu0 0.0
    %1264 = vmatprep.subr.mxu0 0.0
    %1265 = vmatpush1.msra.mxu0 0.0
    %1266 = vmatprep.subr.mxu0 0.0
    %1267 = vmatpush1.msra.mxu0 0.0
    %1268 = vmatprep.subr.mxu0 0.0
    %1269 = vmatpush1.msra.mxu0 0.0
    %1270 = vmatprep.subr.mxu0 0.0
    %1271 = vmatpush1.msra.mxu0 0.0
    %1272 = vmatprep.subr.mxu0 0.0
    %1273 = vmatpush1.msra.mxu0 0.0
    %1274 = vmatprep.subr.mxu0 0.0
    %1275 = vmatpush1.msra.mxu0 0.0
    %1276 = vmatprep.subr.mxu0 0.0
    %1277 = vmatpush1.msra.mxu0 0.0
    %1278 = vmatprep.subr.mxu0 0.0
    %1279 = vmatpush1.msra.mxu0 0.0
    %1280 = vmatprep.subr.mxu0 0.0
    %1281 = vmatpush1.msra.mxu0 0.0
    %1282 = vmatprep.subr.mxu0 0.0
    %1283 = vmatpush1.msra.mxu0 0.0
    %1284 = vmatprep.subr.mxu0 0.0
    %1285 = vmatpush1.msra.mxu0 0.0
    %1286 = vmatprep.subr.mxu0 0.0
    %1287 = vmatpush1.msra.mxu0 0.0
    %1288 = vmatprep.subr.mxu0 0.0
    %1289 = vmatpush1.msra.mxu0 0.0
    %1290 = vmatprep.subr.mxu0 0.0
    %1291 = vmatpush1.msra.mxu0 0.0
    %1292 = vmatprep.subr.mxu0 0.0
    %1293 = vmatpush1.msra.mxu0 0.0
    %1294 = vmatprep.subr.mxu0 0.0
    %1295 = vmatpush1.msra.mxu0 0.0
    %1296 = vmatprep.subr.mxu0 0.0
    %1297 = vmatpush1.msra.mxu0 0.0
    %1298 = vmatprep.subr.mxu0 0.0
    %1299 = vmatpush1.msra.mxu0 0.0
    %1300 = vmatprep.subr.mxu0 0.0
    %1301 = vmatpush1.msra.mxu0 0.0
    %1302 = vmatprep.subr.mxu0 0.0
    %1303 = vmatpush1.msra.mxu0 0.0
    %1304 = vmatprep.mubr.f32.mxu0 0.0
    %1305 = vmatmul.mubr.f32.gmra.mrb[0].mxu0 %v1238
    %v1306 = vpop.f32.mrb[0].mxu0
    %v1307 = vadd.f32 %v1235, %v1306
    %v1308 = vpop.f32.mrb[0].mxu0
    %1309 = vdwg.mxu0
    %v1310 = vmax.f32 %v1307, 0.0
    %v1311 = vld [vmem:[#allocation2 + $0x228] sm:$0xff]
    %v1312 = vld [vmem:[#allocation2 + $0x230] sm:$0xff]
    %v1313 = vld [vmem:[#allocation2 + $0x238] sm:$0xff]
    %v1314 = vld [vmem:[#allocation2 + $0x240] sm:$0xff]
    %v1316 = vsel %vm160, %v1310, 0
    %1318 = vmatprep.subr.mxu0 0.0
    %1319 = vmatpush1.msra.mxu0 %v1311
    %1320 = vmatprep.subr.mxu0 0.0
    %1321 = vmatpush1.msra.mxu0 %v1312
    %1322 = vmatprep.subr.mxu0 0.0
    %1323 = vmatpush1.msra.mxu0 %v1313
    %1324 = vmatprep.subr.mxu0 0.0
    %1325 = vmatpush1.msra.mxu0 %v1314
    %1326 = vmatprep.subr.mxu0 0.0
    %1327 = vmatpush1.msra.mxu0 0.0
    %1328 = vmatprep.subr.mxu0 0.0
    %1329 = vmatpush1.msra.mxu0 0.0
    %1330 = vmatprep.subr.mxu0 0.0
    %1331 = vmatpush1.msra.mxu0 0.0
    %1332 = vmatprep.subr.mxu0 0.0
    %1333 = vmatpush1.msra.mxu0 0.0
    %1334 = vmatprep.subr.mxu0 0.0
    %1335 = vmatpush1.msra.mxu0 0.0
    %1336 = vmatprep.subr.mxu0 0.0
    %1337 = vmatpush1.msra.mxu0 0.0
    %1338 = vmatprep.subr.mxu0 0.0
    %1339 = vmatpush1.msra.mxu0 0.0
    %1340 = vmatprep.subr.mxu0 0.0
    %1341 = vmatpush1.msra.mxu0 0.0
    %1342 = vmatprep.subr.mxu0 0.0
    %1343 = vmatpush1.msra.mxu0 0.0
    %1344 = vmatprep.subr.mxu0 0.0
    %1345 = vmatpush1.msra.mxu0 0.0
    %1346 = vmatprep.subr.mxu0 0.0
    %1347 = vmatpush1.msra.mxu0 0.0
    %1348 = vmatprep.subr.mxu0 0.0
    %1349 = vmatpush1.msra.mxu0 0.0
    %1350 = vmatprep.subr.mxu0 0.0
    %1351 = vmatpush1.msra.mxu0 0.0
    %1352 = vmatprep.subr.mxu0 0.0
    %1353 = vmatpush1.msra.mxu0 0.0
    %1354 = vmatprep.subr.mxu0 0.0
    %1355 = vmatpush1.msra.mxu0 0.0
    %1356 = vmatprep.subr.mxu0 0.0
    %1357 = vmatpush1.msra.mxu0 0.0
    %1358 = vmatprep.subr.mxu0 0.0
    %1359 = vmatpush1.msra.mxu0 0.0
    %1360 = vmatprep.subr.mxu0 0.0
    %1361 = vmatpush1.msra.mxu0 0.0
    %1362 = vmatprep.subr.mxu0 0.0
    %1363 = vmatpush1.msra.mxu0 0.0
    %1364 = vmatprep.subr.mxu0 0.0
    %1365 = vmatpush1.msra.mxu0 0.0
    %1366 = vmatprep.subr.mxu0 0.0
    %1367 = vmatpush1.msra.mxu0 0.0
    %1368 = vmatprep.subr.mxu0 0.0
    %1369 = vmatpush1.msra.mxu0 0.0
    %1370 = vmatprep.subr.mxu0 0.0
    %1371 = vmatpush1.msra.mxu0 0.0
    %1372 = vmatprep.subr.mxu0 0.0
    %1373 = vmatpush1.msra.mxu0 0.0
    %1374 = vmatprep.subr.mxu0 0.0
    %1375 = vmatpush1.msra.mxu0 0.0
    %1376 = vmatprep.subr.mxu0 0.0
    %1377 = vmatpush1.msra.mxu0 0.0
    %1378 = vmatprep.subr.mxu0 0.0
    %1379 = vmatpush1.msra.mxu0 0.0
    %1380 = vmatprep.subr.mxu0 0.0
    %1381 = vmatpush1.msra.mxu0 0.0
    %1382 = vmatprep.mubr.f32.mxu0 0.0
    %1383 = vmatmul.mubr.f32.gmra.mrb[0].mxu0 %v1316
    %v1384 = vpop.f32.mrb[0].mxu0
    %v1385 = vadd.f32 0.0, %v1384
    %v1386 = vpop.f32.mrb[0].mxu0
    %1387 = vdwg.mxu0
    %v1390 = vunpack.c.l.s4 1966171168
    %v1391 = vunpack.c.0.s8 %v1390
    %v1392 = vlaneseq
    %v1393 = vshrl.u32 %v1392, 7
    %v1394 = vsub.s32 %v1391, %v1393
    %v1395 = vrot.slane %v1385, %v1394
    %v1396 = vcombine.high %v1395, %v1395
    %v1398 = vunpack.c.l.s4 1966171168
    %v1399 = vunpack.c.0.s8 %v1398
    %v1400 = vlaneseq
    %v1401 = vshrl.u32 %v1400, 7
    %v1402 = vsub.s32 %v1399, %v1401
    %v1403 = vrot.slane %v1395, %v1402
    %v1405 = vunpack.c.l.s4 1966171168
    %v1406 = vunpack.c.0.s8 %v1405
    %v1407 = vlaneseq
    %v1408 = vshrl.u32 %v1407, 7
    %v1409 = vsub.s32 %v1406, %v1408
    %v1410 = vrot.slane %v1396, %v1409
    %v1411 = vlaneseq
    %v1412 = vshrl.u32 %v1411, 7
    %v1413 = vsub.s32 0, %v1412
    %v1414 = vrot.slane %v1403, %v1413
    %v1415 = vlaneseq
    %v1416 = vshrl.u32 %v1415, 7
    %v1417 = vsub.s32 0, %v1416
    %v1418 = vrot.slane %v1410, %v1417
    %1421 = vrot.lane.b32.xlu0 %v1414, 32
    %v1422 = vpop.permute.xlu0 %1421
    %1423 = vrot.lane.b32.xlu0 %v1418, 32
    %v1424 = vpop.permute.xlu0 %1423
    %1427 = vrot.lane.b32.xlu0 %v1414, 64
    %v1428 = vpop.permute.xlu0 %1427
    %1429 = vrot.lane.b32.xlu0 %v1418, 64
    %v1430 = vpop.permute.xlu0 %1429
    %v1433 = vsel %vm160, %v1414, %v1422
    %v1434 = vsel %vm160, %v1418, %v1424
    %v1435 = vsel %vm1218, %v1433, %v1428
    %v1436 = vsel %vm1218, %v1434, %v1430
    %v1437 = vld [vmem:[#allocation2 + $0x2b0] sm:$0xff]
    %v1438 = vld [vmem:[#allocation2 + $0x2b8] sm:$0xff]
    %v1439 = vld [vmem:[#allocation2 + $0x2c0] sm:$0xff]
    %v1440 = vld [vmem:[#allocation2 + $0x2c8] sm:$0xff]
    %v1441 = vld [vmem:[#allocation2 + $0x2d0] sm:$0xff]
    %v1442 = vld [vmem:[#allocation2 + $0x2d8] sm:$0xff]
    %v1443 = vld [vmem:[#allocation2 + $0x2e0] sm:$0xff]
    %v1444 = vld [vmem:[#allocation2 + $0x2e8] sm:$0xff]
    %v1445 = vld [vmem:[#allocation2 + $0x2f0] sm:$0xff]
    %v1446 = vld [vmem:[#allocation2 + $0x2f8] sm:$0xff]
    %v1447 = vld [vmem:[#allocation2 + $0x300] sm:$0xff]
    %v1448 = vld [vmem:[#allocation2 + $0x308] sm:$0xff]
    %v1449 = vmul.f32 %v1219, %v1435
    %v1450 = vmul.f32 %v1220, %v1436
    %vm1451 = vcmask 785408
    %v1453 = vsel %vm1451, %v1449, 0
    %v1456 = vsel %vm1451, %v1450, 0
    %1458 = vmatprep.subr.mxu0 0.0
    %1459 = vmatpush1.msra.mxu0 %v1437
    %1460 = vmatprep.subr.mxu0 0.0
    %1461 = vmatpush1.msra.mxu0 %v1438
    %1462 = vmatprep.subr.mxu0 0.0
    %1463 = vmatpush1.msra.mxu0 %v1439
    %1464 = vmatprep.subr.mxu0 0.0
    %1465 = vmatpush1.msra.mxu0 %v1440
    %1466 = vmatprep.subr.mxu0 0.0
    %1467 = vmatpush1.msra.mxu0 %v1441
    %1468 = vmatprep.subr.mxu0 0.0
    %1469 = vmatpush1.msra.mxu0 %v1442
    %1470 = vmatprep.subr.mxu0 0.0
    %1471 = vmatpush1.msra.mxu0 %v1443
    %1472 = vmatprep.subr.mxu0 0.0
    %1473 = vmatpush1.msra.mxu0 %v1444
    %1474 = vmatprep.subr.mxu0 0.0
    %1475 = vmatpush1.msra.mxu0 %v1445
    %1476 = vmatprep.subr.mxu0 0.0
    %1477 = vmatpush1.msra.mxu0 %v1446
    %1478 = vmatprep.subr.mxu0 0.0
    %1479 = vmatpush1.msra.mxu0 %v1447
    %1480 = vmatprep.subr.mxu0 0.0
    %1481 = vmatpush1.msra.mxu0 %v1448
    %1482 = vmatprep.subr.mxu0 0.0
    %1483 = vmatpush1.msra.mxu0 0.0
    %1484 = vmatprep.subr.mxu0 0.0
    %1485 = vmatpush1.msra.mxu0 0.0
    %1486 = vmatprep.subr.mxu0 0.0
    %1487 = vmatpush1.msra.mxu0 0.0
    %1488 = vmatprep.subr.mxu0 0.0
    %1489 = vmatpush1.msra.mxu0 0.0
    %1490 = vmatprep.subr.mxu0 0.0
    %1491 = vmatpush1.msra.mxu0 0.0
    %1492 = vmatprep.subr.mxu0 0.0
    %1493 = vmatpush1.msra.mxu0 0.0
    %1494 = vmatprep.subr.mxu0 0.0
    %1495 = vmatpush1.msra.mxu0 0.0
    %1496 = vmatprep.subr.mxu0 0.0
    %1497 = vmatpush1.msra.mxu0 0.0
    %1498 = vmatprep.subr.mxu0 0.0
    %1499 = vmatpush1.msra.mxu0 0.0
    %1500 = vmatprep.subr.mxu0 0.0
    %1501 = vmatpush1.msra.mxu0 0.0
    %1502 = vmatprep.subr.mxu0 0.0
    %1503 = vmatpush1.msra.mxu0 0.0
    %1504 = vmatprep.subr.mxu0 0.0
    %1505 = vmatpush1.msra.mxu0 0.0
    %1506 = vmatprep.subr.mxu0 0.0
    %1507 = vmatpush1.msra.mxu0 0.0
    %1508 = vmatprep.subr.mxu0 0.0
    %1509 = vmatpush1.msra.mxu0 0.0
    %1510 = vmatprep.subr.mxu0 0.0
    %1511 = vmatpush1.msra.mxu0 0.0
    %1512 = vmatprep.subr.mxu0 0.0
    %1513 = vmatpush1.msra.mxu0 0.0
    %1514 = vmatprep.subr.mxu0 0.0
    %1515 = vmatpush1.msra.mxu0 0.0
    %1516 = vmatprep.subr.mxu0 0.0
    %1517 = vmatpush1.msra.mxu0 0.0
    %1518 = vmatprep.subr.mxu0 0.0
    %1519 = vmatpush1.msra.mxu0 0.0
    %1520 = vmatprep.subr.mxu0 0.0
    %1521 = vmatpush1.msra.mxu0 0.0
    %1522 = vmatprep.mubr.f32.mxu0 0.0
    %1523 = vmatmul.mubr.f32.gmra.mrb[0].mxu0 %v1453
    %v1524 = vpop.f32.mrb[0].mxu0
    %v1525 = vadd.f32 0.0, %v1524
    %v1526 = vpop.f32.mrb[0].mxu0
    %1527 = vmatprep.mubr.f32.mxu0 0.0
    %1528 = vmatmul.mubr.f32.gmra.mrb[0].mxu0 %v1456
    %v1529 = vpop.f32.mrb[0].mxu0
    %v1530 = vadd.f32 0.0, %v1529
    %v1531 = vpop.f32.mrb[0].mxu0
    %1532 = vdwg.mxu0
    %vm1533 = vcmp.gt.f32.partialorder %v36, 0.0
    %vm1534 = vcmp.gt.f32.partialorder %v41, 0.0
    %v1535 = vsel %vm1533, %v1525, -1e+30
    %v1536 = vsel %vm1534, %v1530, -1e+30
    %vm1537 = vcmask 23552
    %v1538 = vsel %vm1537, %v1535, -inf
    %v1539 = vrot.slane %v1538, 4
    %v1540 = vmax.f32 %v1538, %v1539
    %v1541 = vrot.slane %v1540, 2
    %v1542 = vmax.f32 %v1540, %v1541
    %v1543 = vrot.slane %v1542, 1
    %v1544 = vmax.f32 %v1542, %v1543
    %v1545 = vsel %vm1537, %v1536, -inf
    %v1546 = vrot.slane %v1545, 4
    %v1547 = vmax.f32 %v1545, %v1546
    %v1548 = vrot.slane %v1547, 2
    %v1549 = vmax.f32 %v1547, %v1548
    %v1550 = vrot.slane %v1549, 1
    %v1551 = vmax.f32 %v1549, %v1550
    %v1552 = vsub.f32 %v1535, %v1544
    %v1553 = vsub.f32 %v1536, %v1551
    %v1554 = vmul.f32 %v1552, 1.442695
    %v1555 = vpow.pop %v1554
    %v1556 = vmul.f32 %v1553, 1.442695
    %v1557 = vpow.pop %v1556
    %v1558 = vsel %vm1537, %v1555, 0.0
    %v1559 = vrot.slane %v1558, 4
    %v1560 = vadd.f32 %v1558, %v1559
    %v1561 = vrot.slane %v1560, 2
    %v1562 = vadd.f32 %v1560, %v1561
    %v1563 = vrot.slane %v1562, 1
    %v1564 = vadd.f32 %v1562, %v1563
    %v1565 = vsel %vm1537, %v1557, 0.0
    %v1566 = vrot.slane %v1565, 4
    %v1567 = vadd.f32 %v1565, %v1566
    %v1568 = vrot.slane %v1567, 2
    %v1569 = vadd.f32 %v1567, %v1568
    %v1570 = vrot.slane %v1569, 1
    %v1571 = vadd.f32 %v1569, %v1570
    %v1572 = vmax.f32 %v1564, 1e-30
    %v1573 = vmax.f32 %v1571, 1e-30
    %v1574 = vrcp.pop %v1572
    %v1575 = vrcp.pop %v1573
    %v1576 = vmul.f32 %v1555, %v1574
    %v1577 = vmul.f32 %v1557, %v1575
    %v1578 = vld [vmem:[#allocation2 + $0x310] sm:$0x7]
    %v1580 = vsel %vm1537, %v1576, 0
    %v1583 = vsel %vm1537, %v1577, 0
    %vm1585 = vcmask 1042432
    %v1587 = vsel %vm1585, %v1578, 0
    %1589 = vmatprep.subr.mxu0 0.0
    %1590 = vmatpush1.msra.mxu0 %v1587
    %1591 = vmatprep.subr.mxu0 0.0
    %1592 = vmatpush1.msra.mxu0 0.0
    %1593 = vmatprep.subr.mxu0 0.0
    %1594 = vmatpush1.msra.mxu0 0.0
    %1595 = vmatprep.subr.mxu0 0.0
    %1596 = vmatpush1.msra.mxu0 0.0
    %1597 = vmatprep.subr.mxu0 0.0
    %1598 = vmatpush1.msra.mxu0 0.0
    %1599 = vmatprep.subr.mxu0 0.0
    %1600 = vmatpush1.msra.mxu0 0.0
    %1601 = vmatprep.subr.mxu0 0.0
    %1602 = vmatpush1.msra.mxu0 0.0
    %1603 = vmatprep.subr.mxu0 0.0
    %1604 = vmatpush1.msra.mxu0 0.0
    %1605 = vmatprep.subr.mxu0 0.0
    %1606 = vmatpush1.msra.mxu0 0.0
    %1607 = vmatprep.subr.mxu0 0.0
    %1608 = vmatpush1.msra.mxu0 0.0
    %1609 = vmatprep.subr.mxu0 0.0
    %1610 = vmatpush1.msra.mxu0 0.0
    %1611 = vmatprep.subr.mxu0 0.0
    %1612 = vmatpush1.msra.mxu0 0.0
    %1613 = vmatprep.subr.mxu0 0.0
    %1614 = vmatpush1.msra.mxu0 0.0
    %1615 = vmatprep.subr.mxu0 0.0
    %1616 = vmatpush1.msra.mxu0 0.0
    %1617 = vmatprep.subr.mxu0 0.0
    %1618 = vmatpush1.msra.mxu0 0.0
    %1619 = vmatprep.subr.mxu0 0.0
    %1620 = vmatpush1.msra.mxu0 0.0
    %1621 = vmatprep.subr.mxu0 0.0
    %1622 = vmatpush1.msra.mxu0 0.0
    %1623 = vmatprep.subr.mxu0 0.0
    %1624 = vmatpush1.msra.mxu0 0.0
    %1625 = vmatprep.subr.mxu0 0.0
    %1626 = vmatpush1.msra.mxu0 0.0
    %1627 = vmatprep.subr.mxu0 0.0
    %1628 = vmatpush1.msra.mxu0 0.0
    %1629 = vmatprep.subr.mxu0 0.0
    %1630 = vmatpush1.msra.mxu0 0.0
    %1631 = vmatprep.subr.mxu0 0.0
    %1632 = vmatpush1.msra.mxu0 0.0
    %1633 = vmatprep.subr.mxu0 0.0
    %1634 = vmatpush1.msra.mxu0 0.0
    %1635 = vmatprep.subr.mxu0 0.0
    %1636 = vmatpush1.msra.mxu0 0.0
    %1637 = vmatprep.subr.mxu0 0.0
    %1638 = vmatpush1.msra.mxu0 0.0
    %1639 = vmatprep.subr.mxu0 0.0
    %1640 = vmatpush1.msra.mxu0 0.0
    %1641 = vmatprep.subr.mxu0 0.0
    %1642 = vmatpush1.msra.mxu0 0.0
    %1643 = vmatprep.subr.mxu0 0.0
    %1644 = vmatpush1.msra.mxu0 0.0
    %1645 = vmatprep.subr.mxu0 0.0
    %1646 = vmatpush1.msra.mxu0 0.0
    %1647 = vmatprep.subr.mxu0 0.0
    %1648 = vmatpush1.msra.mxu0 0.0
    %1649 = vmatprep.subr.mxu0 0.0
    %1650 = vmatpush1.msra.mxu0 0.0
    %1651 = vmatprep.subr.mxu0 0.0
    %1652 = vmatpush1.msra.mxu0 0.0
    %1653 = vmatprep.mubr.f32.mxu0 0.0
    %1654 = vmatmul.mubr.f32.gmra.mrb[0].mxu0 %v1580
    %v1655 = vpop.f32.mrb[0].mxu0
    %v1656 = vadd.f32 0.0, %v1655
    %v1657 = vpop.f32.mrb[0].mxu0
    %1658 = vmatprep.mubr.f32.mxu0 0.0
    %1659 = vmatmul.mubr.f32.gmra.mrb[0].mxu0 %v1583
    %v1660 = vpop.f32.mrb[0].mxu0
    %v1661 = vadd.f32 0.0, %v1660
    %v1662 = vpop.f32.mrb[0].mxu0
    %1663 = vdwg.mxu0
    %v1664 = vld [vmem:[#allocation2 + $0x318] sm:$0x3]
    %v1665 = vmul.f32 %v1656, %v1219
    %v1666 = vmul.f32 %v1661, %v1220
    %vm1667 = vcmask 130048
    %v1669 = vsel %vm1667, %v1664, 0
    %1671 = vmatprep.subr.mxu0 0.0
    %1672 = vmatpush1.msra.mxu0 %v1665
    %1673 = vmatprep.subr.mxu0 0.0
    %1674 = vmatpush1.msra.mxu0 %v1666
    %1675 = vmatprep.subr.mxu0 0.0
    %1676 = vmatpush1.msra.mxu0 0.0
    %1677 = vmatprep.subr.mxu0 0.0
    %1678 = vmatpush1.msra.mxu0 0.0
    %1679 = vmatprep.subr.mxu0 0.0
    %1680 = vmatpush1.msra.mxu0 0.0
    %1681 = vmatprep.subr.mxu0 0.0
    %1682 = vmatpush1.msra.mxu0 0.0
    %1683 = vmatprep.subr.mxu0 0.0
    %1684 = vmatpush1.msra.mxu0 0.0
    %1685 = vmatprep.subr.mxu0 0.0
    %1686 = vmatpush1.msra.mxu0 0.0
    %1687 = vmatprep.subr.mxu0 0.0
    %1688 = vmatpush1.msra.mxu0 0.0
    %1689 = vmatprep.subr.mxu0 0.0
    %1690 = vmatpush1.msra.mxu0 0.0
    %1691 = vmatprep.subr.mxu0 0.0
    %1692 = vmatpush1.msra.mxu0 0.0
    %1693 = vmatprep.subr.mxu0 0.0
    %1694 = vmatpush1.msra.mxu0 0.0
    %1695 = vmatprep.subr.mxu0 0.0
    %1696 = vmatpush1.msra.mxu0 0.0
    %1697 = vmatprep.subr.mxu0 0.0
    %1698 = vmatpush1.msra.mxu0 0.0
    %1699 = vmatprep.subr.mxu0 0.0
    %1700 = vmatpush1.msra.mxu0 0.0
    %1701 = vmatprep.subr.mxu0 0.0
    %1702 = vmatpush1.msra.mxu0 0.0
    %1703 = vmatprep.subr.mxu0 0.0
    %1704 = vmatpush1.msra.mxu0 0.0
    %1705 = vmatprep.subr.mxu0 0.0
    %1706 = vmatpush1.msra.mxu0 0.0
    %1707 = vmatprep.subr.mxu0 0.0
    %1708 = vmatpush1.msra.mxu0 0.0
    %1709 = vmatprep.subr.mxu0 0.0
    %1710 = vmatpush1.msra.mxu0 0.0
    %1711 = vmatprep.subr.mxu0 0.0
    %1712 = vmatpush1.msra.mxu0 0.0
    %1713 = vmatprep.subr.mxu0 0.0
    %1714 = vmatpush1.msra.mxu0 0.0
    %1715 = vmatprep.subr.mxu0 0.0
    %1716 = vmatpush1.msra.mxu0 0.0
    %1717 = vmatprep.subr.mxu0 0.0
    %1718 = vmatpush1.msra.mxu0 0.0
    %1719 = vmatprep.subr.mxu0 0.0
    %1720 = vmatpush1.msra.mxu0 0.0
    %1721 = vmatprep.subr.mxu0 0.0
    %1722 = vmatpush1.msra.mxu0 0.0
    %1723 = vmatprep.subr.mxu0 0.0
    %1724 = vmatpush1.msra.mxu0 0.0
    %1725 = vmatprep.subr.mxu0 0.0
    %1726 = vmatpush1.msra.mxu0 0.0
    %1727 = vmatprep.subr.mxu0 0.0
    %1728 = vmatpush1.msra.mxu0 0.0
    %1729 = vmatprep.subr.mxu0 0.0
    %1730 = vmatpush1.msra.mxu0 0.0
    %1731 = vmatprep.subr.mxu0 0.0
    %1732 = vmatpush1.msra.mxu0 0.0
    %1733 = vmatprep.subr.mxu0 0.0
    %1734 = vmatpush1.msra.mxu0 0.0
    %1735 = vmatprep.mubr.f32.mxu0 0.0
    %1736 = vmatmul.mubr.f32.gmra.mrb[0].mxu0 %v1669
    %v1737 = vpop.f32.mrb[0].mxu0
    %v1738 = vadd.f32 0.0, %v1737
    %v1739 = vpop.f32.mrb[0].mxu0
    %1740 = vdwg.mxu0
    %v1741 = vld [vmem:[#allocation2 + $0x248] sm:$0xff]
    %v1742 = vld [vmem:[#allocation2 + $0x250] sm:$0xff]
    %v1743 = vld [vmem:[#allocation2 + $0x258] sm:$0xff]
    %v1744 = vld [vmem:[#allocation2 + $0x260] sm:$0xff]
    %v1745 = vld [vmem:[#allocation2 + $0x268] sm:$0xff]
    %v1746 = vld [vmem:[#allocation2 + $0x270] sm:$0xff]
    %v1747 = vld [vmem:[#allocation2 + $0x278] sm:$0xff]
    %v1748 = vld [vmem:[#allocation2 + $0x280] sm:$0xff]
    %v1749 = vld [vmem:[#allocation2 + $0x288] sm:$0xff]
    %v1750 = vld [vmem:[#allocation2 + $0x290] sm:$0xff]
    %v1751 = vld [vmem:[#allocation2 + $0x298] sm:$0xff]
    %v1752 = vld [vmem:[#allocation2 + $0x2a0] sm:$0xff]
    %v1753 = vld [vmem:[#allocation2 + $0x2a8] sm:$0x1]
    %1754 = vrot.lane.b32.xlu0 %v1385, 96
    %v1755 = vpop.permute.xlu0 %1754
    %v1758 = vsel %vm1451, %v1738, 0
    %1760 = vmatprep.subr.mxu0 0.0
    %1761 = vmatpush1.msra.mxu0 %v1741
    %1762 = vmatprep.subr.mxu0 0.0
    %1763 = vmatpush1.msra.mxu0 %v1742
    %1764 = vmatprep.subr.mxu0 0.0
    %1765 = vmatpush1.msra.mxu0 %v1743
    %1766 = vmatprep.subr.mxu0 0.0
    %1767 = vmatpush1.msra.mxu0 %v1744
    %1768 = vmatprep.subr.mxu0 0.0
    %1769 = vmatpush1.msra.mxu0 %v1745
    %1770 = vmatprep.subr.mxu0 0.0
    %1771 = vmatpush1.msra.mxu0 %v1746
    %1772 = vmatprep.subr.mxu0 0.0
    %1773 = vmatpush1.msra.mxu0 %v1747
    %1774 = vmatprep.subr.mxu0 0.0
    %1775 = vmatpush1.msra.mxu0 %v1748
    %1776 = vmatprep.subr.mxu0 0.0
    %1777 = vmatpush1.msra.mxu0 %v1749
    %1778 = vmatprep.subr.mxu0 0.0
    %1779 = vmatpush1.msra.mxu0 %v1750
    %1780 = vmatprep.subr.mxu0 0.0
    %1781 = vmatpush1.msra.mxu0 %v1751
    %1782 = vmatprep.subr.mxu0 0.0
    %1783 = vmatpush1.msra.mxu0 %v1752
    %1784 = vmatprep.subr.mxu0 0.0
    %1785 = vmatpush1.msra.mxu0 0.0
    %1786 = vmatprep.subr.mxu0 0.0
    %1787 = vmatpush1.msra.mxu0 0.0
    %1788 = vmatprep.subr.mxu0 0.0
    %1789 = vmatpush1.msra.mxu0 0.0
    %1790 = vmatprep.subr.mxu0 0.0
    %1791 = vmatpush1.msra.mxu0 0.0
    %1792 = vmatprep.subr.mxu0 0.0
    %1793 = vmatpush1.msra.mxu0 0.0
    %1794 = vmatprep.subr.mxu0 0.0
    %1795 = vmatpush1.msra.mxu0 0.0
    %1796 = vmatprep.subr.mxu0 0.0
    %1797 = vmatpush1.msra.mxu0 0.0
    %1798 = vmatprep.subr.mxu0 0.0
    %1799 = vmatpush1.msra.mxu0 0.0
    %1800 = vmatprep.subr.mxu0 0.0
    %1801 = vmatpush1.msra.mxu0 0.0
    %1802 = vmatprep.subr.mxu0 0.0
    %1803 = vmatpush1.msra.mxu0 0.0
    %1804 = vmatprep.subr.mxu0 0.0
    %1805 = vmatpush1.msra.mxu0 0.0
    %1806 = vmatprep.subr.mxu0 0.0
    %1807 = vmatpush1.msra.mxu0 0.0
    %1808 = vmatprep.subr.mxu0 0.0
    %1809 = vmatpush1.msra.mxu0 0.0
    %1810 = vmatprep.subr.mxu0 0.0
    %1811 = vmatpush1.msra.mxu0 0.0
    %1812 = vmatprep.subr.mxu0 0.0
    %1813 = vmatpush1.msra.mxu0 0.0
    %1814 = vmatprep.subr.mxu0 0.0
    %1815 = vmatpush1.msra.mxu0 0.0
    %1816 = vmatprep.subr.mxu0 0.0
    %1817 = vmatpush1.msra.mxu0 0.0
    %1818 = vmatprep.subr.mxu0 0.0
    %1819 = vmatpush1.msra.mxu0 0.0
    %1820 = vmatprep.subr.mxu0 0.0
    %1821 = vmatpush1.msra.mxu0 0.0
    %1822 = vmatprep.subr.mxu0 0.0
    %1823 = vmatpush1.msra.mxu0 0.0
    %1824 = vmatprep.mubr.f32.mxu0 0.0
    %1825 = vmatmul.mubr.f32.gmra.mrb[0].mxu0 %v1758
    %v1826 = vpop.f32.mrb[0].mxu0
    %v1827 = vadd.f32 %v1755, %v1826
    %v1828 = vpop.f32.mrb[0].mxu0
    %1829 = vdwg.mxu0
    %v1830 = vlaneseq
    %v1831 = vshrl.u32 %v1830, 7
    %v1832 = vsub.s32 0, %v1831
    %v1833 = vrot.slane %v1753, %v1832
    %v1834 = vadd.f32 %v1827, %v1833
    %v1835 = vmax.f32 %v1834, 0.0
    %v1836 = vld [vmem:[#allocation2 + $0x320] sm:$0xff]
    %v1837 = vld [vmem:[#allocation2 + $0x328] sm:$0xff]
    %v1838 = vld [vmem:[#allocation2 + $0x330] sm:$0xff]
    %v1839 = vld [vmem:[#allocation2 + $0x338] sm:$0xff]
    %v1840 = vld [vmem:[#allocation2 + $0x340] sm:$0xff]
    %v1841 = vld [vmem:[#allocation2 + $0x348] sm:$0xff]
    %v1842 = vld [vmem:[#allocation2 + $0x350] sm:$0xff]
    %v1843 = vld [vmem:[#allocation2 + $0x358] sm:$0xff]
    %v1844 = vld [vmem:[#allocation2 + $0x360] sm:$0xff]
    %v1845 = vld [vmem:[#allocation2 + $0x368] sm:$0xff]
    %v1846 = vld [vmem:[#allocation2 + $0x370] sm:$0xff]
    %v1847 = vld [vmem:[#allocation2 + $0x378] sm:$0xff]
    %v1848 = vld [vmem:[#allocation2 + $0x380] sm:$0x1]
    %v1849 = vlaneseq
    %v1850 = vshrl.u32 %v1849, 7
    %v1851 = vsub.s32 0, %v1850
    %v1852 = vrot.slane %v1848, %v1851
    %v1854 = vsel %vm1451, %v1835, 0
    %1856 = vmatprep.subr.mxu0 0.0
    %1857 = vmatpush1.msra.mxu0 %v1836
    %1858 = vmatprep.subr.mxu0 0.0
    %1859 = vmatpush1.msra.mxu0 %v1837
    %1860 = vmatprep.subr.mxu0 0.0
    %1861 = vmatpush1.msra.mxu0 %v1838
    %1862 = vmatprep.subr.mxu0 0.0
    %1863 = vmatpush1.msra.mxu0 %v1839
    %1864 = vmatprep.subr.mxu0 0.0
    %1865 = vmatpush1.msra.mxu0 %v1840
    %1866 = vmatprep.subr.mxu0 0.0
    %1867 = vmatpush1.msra.mxu0 %v1841
    %1868 = vmatprep.subr.mxu0 0.0
    %1869 = vmatpush1.msra.mxu0 %v1842
    %1870 = vmatprep.subr.mxu0 0.0
    %1871 = vmatpush1.msra.mxu0 %v1843
    %1872 = vmatprep.subr.mxu0 0.0
    %1873 = vmatpush1.msra.mxu0 %v1844
    %1874 = vmatprep.subr.mxu0 0.0
    %1875 = vmatpush1.msra.mxu0 %v1845
    %1876 = vmatprep.subr.mxu0 0.0
    %1877 = vmatpush1.msra.mxu0 %v1846
    %1878 = vmatprep.subr.mxu0 0.0
    %1879 = vmatpush1.msra.mxu0 %v1847
    %1880 = vmatprep.subr.mxu0 0.0
    %1881 = vmatpush1.msra.mxu0 0.0
    %1882 = vmatprep.subr.mxu0 0.0
    %1883 = vmatpush1.msra.mxu0 0.0
    %1884 = vmatprep.subr.mxu0 0.0
    %1885 = vmatpush1.msra.mxu0 0.0
    %1886 = vmatprep.subr.mxu0 0.0
    %1887 = vmatpush1.msra.mxu0 0.0
    %1888 = vmatprep.subr.mxu0 0.0
    %1889 = vmatpush1.msra.mxu0 0.0
    %1890 = vmatprep.subr.mxu0 0.0
    %1891 = vmatpush1.msra.mxu0 0.0
    %1892 = vmatprep.subr.mxu0 0.0
    %1893 = vmatpush1.msra.mxu0 0.0
    %1894 = vmatprep.subr.mxu0 0.0
    %1895 = vmatpush1.msra.mxu0 0.0
    %1896 = vmatprep.subr.mxu0 0.0
    %1897 = vmatpush1.msra.mxu0 0.0
    %1898 = vmatprep.subr.mxu0 0.0
    %1899 = vmatpush1.msra.mxu0 0.0
    %1900 = vmatprep.subr.mxu0 0.0
    %1901 = vmatpush1.msra.mxu0 0.0
    %1902 = vmatprep.subr.mxu0 0.0
    %1903 = vmatpush1.msra.mxu0 0.0
    %1904 = vmatprep.subr.mxu0 0.0
    %1905 = vmatpush1.msra.mxu0 0.0
    %1906 = vmatprep.subr.mxu0 0.0
    %1907 = vmatpush1.msra.mxu0 0.0
    %1908 = vmatprep.subr.mxu0 0.0
    %1909 = vmatpush1.msra.mxu0 0.0
    %1910 = vmatprep.subr.mxu0 0.0
    %1911 = vmatpush1.msra.mxu0 0.0
    %1912 = vmatprep.subr.mxu0 0.0
    %1913 = vmatpush1.msra.mxu0 0.0
    %1914 = vmatprep.subr.mxu0 0.0
    %1915 = vmatpush1.msra.mxu0 0.0
    %1916 = vmatprep.subr.mxu0 0.0
    %1917 = vmatpush1.msra.mxu0 0.0
    %1918 = vmatprep.subr.mxu0 0.0
    %1919 = vmatpush1.msra.mxu0 0.0
    %1920 = vmatprep.mubr.f32.mxu0 0.0
    %1921 = vmatmul.mubr.f32.gmra.mrb[0].mxu0 %v1854
    %v1922 = vpop.f32.mrb[0].mxu0
    %v1923 = vadd.f32 %v1852, %v1922
    %v1924 = vpop.f32.mrb[0].mxu0
    %1925 = vdwg.mxu0
    %vm1926 = vcmask 9216
    %1927 = vst.msk [vmem:[#allocation5] sm:$0x3] %vm1926, %v1923
    // Predicated region
    $region18: #{hierarchical_encoding_network.1} parent=1 // pred_check
      _
    $region19: #{hierarchical_encoding_network.1} parent=1 // pred_check_branch
      %1929 = sbr.rel (0) target = $region21
    $region20: #{hierarchical_encoding_network.1} parent=1 // pred_region
      %s1931 = ssub.s32 32, 32
      %1932 = vsyncadd [#allocation4], %s1931
      %s1934 = sshll.u32 [#allocation5], 4
      %s1935 = int_to_ptr.vmem [resolvable:$true] %s1934
      %1937 = dma.vmem_to_hbm [thread:$0]  %s1935, 32, %s3, [#allocation4]
    $region21: #{hierarchical_encoding_network.1} parent=1 // pred_fallthru
      _
    // Predicated region
    $region22: #{hierarchical_encoding_network.1} parent=1 // pred_check
      _
    $region23: #{hierarchical_encoding_network.1} parent=1 // pred_check_branch
      %1939 = sbr.rel (0) target = $region25
    $region24: #{hierarchical_encoding_network.1} parent=1 // pred_region
      %1940 = dma.done [#allocation4], 32
    $region25: #{hierarchical_encoding_network.1} parent=1 // pred_fallthru
      _
    %1941 = vsyncpa [#allocation3], 1
    %1942 = vsyncpa [#allocation4], 1

</llo_original>
